<compile_context>
chip_gen: v5e
topology: v5e:2x2
jax: 0.10.0
libtpu: 0.0.40
codegen_flags: <defaults>
</compile_context>

<pallas_src>
import functools

import jax
import jax.numpy as jnp
from jax.experimental import pallas as pl
from jax.experimental.pallas import tpu as pltpu


# ----------------------------------------------------------------------------
# Fused Pallas kernel (all layers + FC, grid-free)
# ----------------------------------------------------------------------------
def _make_fused_lstm_kernel(num_layers, T, B_pad, H):
    """Kernel refs: (x, [wih, whh, b] * L, fc_w, fc_b, out, seq_scratch)."""

    def kernel(*refs):
        x_ref = refs[0]
        layer_refs = refs[1:1 + 3 * num_layers]
        fc_w_ref = refs[1 + 3 * num_layers]
        fc_b_ref = refs[2 + 3 * num_layers]
        out_ref = refs[3 + 3 * num_layers]
        seq_sc = refs[4 + 3 * num_layers]          # VMEM (T*B_pad, H)

        cur = x_ref[...]                           # (T*B_pad, D_in) layer input seq
        h_last = None
        for l in range(num_layers):                # static Python unroll over layers
            wih = layer_refs[3 * l][...]           # (D_l, 4H)
            whh = layer_refs[3 * l + 1][...]       # (H, 4H)
            b = layer_refs[3 * l + 2][...]         # (1, 4H)

            # Parallel phase: input projection for ALL timesteps in one MXU matmul.
            gx = jnp.dot(cur, wih, preferred_element_type=jnp.float32) + b  # (T*B_pad, 4H)

            # Serial phase: single small (B,H)@(H,4H) matmul per timestep.
            h = jnp.zeros((B_pad, H), jnp.float32)
            c = jnp.zeros((B_pad, H), jnp.float32)
            for t in range(T):                     # static unroll; T is small
                g = gx[t * B_pad:(t + 1) * B_pad, :] + jnp.dot(
                    h, whh, preferred_element_type=jnp.float32)             # (B_pad, 4H)
                # NOTE: 32-lane gate slices of a 128-lane vreg cost a few XLU ops;
                # acceptable here (XLU slot is otherwise idle).  For large H make
                # H a multiple of 128.
                i_g = jax.nn.sigmoid(g[:, 0 * H:1 * H])
                f_g = jax.nn.sigmoid(g[:, 1 * H:2 * H])
                g_g = jnp.tanh(g[:, 2 * H:3 * H])
                o_g = jax.nn.sigmoid(g[:, 3 * H:4 * H])
                c = f_g * c + i_g * g_g
                h = o_g * jnp.tanh(c)
                if l < num_layers - 1:
                    # Inter-layer sequence lives purely in VMEM scratch.
                    seq_sc[t * B_pad:(t + 1) * B_pad, :] = h
            if l < num_layers - 1:
                cur = seq_sc[...]                  # (T*B_pad, H) -> next layer input
            else:
                h_last = h                         # == out[:, -1, :]

        # Fused FC on the final timestep only; no (T,B,H) output ever hits HBM.
        logits = (jnp.dot(h_last, fc_w_ref[...], preferred_element_type=jnp.float32)
                  + fc_b_ref[...])                 # (B_pad, O)
        out_ref[...] = logits.astype(out_ref.dtype)

    return kernel


# ----------------------------------------------------------------------------
# Wrapper
# ----------------------------------------------------------------------------
@jax.jit
def lstm_forward(x, params):
    """Matches LSTM.forward: multi-layer LSTM over x (B, T, D), fc on last step."""
    B, T, D = x.shape
    layers = params["layers"]
    num_layers = len(layers)
    H = layers[0][1].shape[0]                      # whh is (H, 4H)
    O = params["fc_w"].shape[1]

    B_pad = ((B + 7) // 8) * 8                     # pad batch to f32 sublane width

    xt = jnp.transpose(x, (1, 0, 2))               # (T, B, D) time-major
    xt = jnp.pad(xt, ((0, 0), (0, B_pad - B), (0, 0)))
    x_flat = xt.reshape(T * B_pad, D)              # (T*B_pad, D)

    flat_w = []
    for (wih, whh, b) in layers:
        flat_w += [wih, whh, b]

    n_in = 1 + len(flat_w) + 2
    kernel = _make_fused_lstm_kernel(num_layers, T, B_pad, H)
    out_pad = pl.pallas_call(
        kernel,
        out_shape=jax.ShapeDtypeStruct((B_pad, O), jnp.float32),
        in_specs=[pl.BlockSpec(memory_space=pltpu.MemorySpace.VMEM)] * n_in,
        out_specs=pl.BlockSpec(memory_space=pltpu.MemorySpace.VMEM),
        scratch_shapes=[pltpu.VMEM((T * B_pad, H), jnp.float32)],
    )(x_flat, *flat_w, params["fc_w"], params["fc_b"])
    return out_pad[:B]                             # drop padded batch rows


# ----------------------------------------------------------------------------
# Parameter init (PyTorch-shaped: W_ih (4H, D_in), W_hh (4H, H)); stored
# pre-transposed for the kernel, with the two biases pre-summed.
# ----------------------------------------------------------------------------
def init_params(key, input_dim, hidden_dim, layer_dim, output_dim):
    H = hidden_dim
    scale = 1.0 / jnp.sqrt(jnp.float32(H))
    layers = []
    for layer in range(layer_dim):
        d_in = input_dim if layer == 0 else H
        key, k1, k2, k3, k4 = jax.random.split(key, 5)
        w_ih = jax.random.uniform(k1, (4 * H, d_in), jnp.float32, -scale, scale)
        w_hh = jax.random.uniform(k2, (4 * H, H), jnp.float32, -scale, scale)
        b_ih = jax.random.uniform(k3, (4 * H,), jnp.float32, -scale, scale)
        b_hh = jax.random.uniform(k4, (4 * H,), jnp.float32, -scale, scale)
        layers.append((w_ih.T, w_hh.T, (b_ih + b_hh)[None, :]))
    key, k5, k6 = jax.random.split(key, 3)
    fc_w = jax.random.uniform(k5, (output_dim, H), jnp.float32, -scale, scale)
    fc_b = jax.random.uniform(k6, (output_dim,), jnp.float32, -scale, scale)
    return {"layers": layers, "fc_w": fc_w.T, "fc_b": fc_b[None, :]}


# ----------------------------------------------------------------------------
# Pure-JAX reference (correctness check)
# ----------------------------------------------------------------------------
def lstm_ref(x, params):
    B = x.shape[0]
    seq = x
    for (wih, whh, b) in params["layers"]:
        H = whh.shape[0]

        def step(carry, xt):
            h, c = carry
            gates = xt @ wih + h @ whh + b[0]
            i = jax.nn.sigmoid(gates[:, 0 * H:1 * H])
            f = jax.nn.sigmoid(gates[:, 1 * H:2 * H])
            g = jnp.tanh(gates[:, 2 * H:3 * H])
            o = jax.nn.sigmoid(gates[:, 3 * H:4 * H])
            c = f * c + i * g
            h = o * jnp.tanh(c)
            return (h, c), h

        h0 = jnp.zeros((B, H), jnp.float32)
        c0 = jnp.zeros((B, H), jnp.float32)
        (_, _), ys = jax.lax.scan(step, (h0, c0), jnp.transpose(seq, (1, 0, 2)))
        seq = jnp.transpose(ys, (1, 0, 2))
    return seq[:, -1, :] @ params["fc_w"] + params["fc_b"][0]


# ----------------------------------------------------------------------------
if __name__ == "__main__":
    batch, seq_len = 2, 8
    input_dim, hidden_dim, layer_dim, output_dim = 16, 32, 2, 8

    key = jax.random.PRNGKey(0)
    kx, kp = jax.random.split(key)
    x = jax.random.normal(kx, (batch, seq_len, input_dim), jnp.float32)
    params = init_params(kp, input_dim, hidden_dim, layer_dim, output_dim)

    out = lstm_forward(x, params)
    out = jax.block_until_ready(out)

    ref = lstm_ref(x, params)
    assert out.shape == (batch, output_dim), out.shape
    assert jnp.allclose(out, ref, rtol=2e-3, atol=2e-3), (out, ref)

    print("KERNEL_OK")
</pallas_src>

<mosaic_0001>
module attributes {stable_mosaic.version = 11 : i64} {
  func.func @kernel(%arg0: memref<64x16xf32, #tpu.memory_space<vmem>>, %arg1: memref<16x128xf32, #tpu.memory_space<vmem>>, %arg2: memref<32x128xf32, #tpu.memory_space<vmem>>, %arg3: memref<1x128xf32, #tpu.memory_space<vmem>>, %arg4: memref<32x128xf32, #tpu.memory_space<vmem>>, %arg5: memref<32x128xf32, #tpu.memory_space<vmem>>, %arg6: memref<1x128xf32, #tpu.memory_space<vmem>>, %arg7: memref<32x8xf32, #tpu.memory_space<vmem>>, %arg8: memref<1x8xf32, #tpu.memory_space<vmem>>, %arg9: memref<8x8xf32, #tpu.memory_space<vmem>>, %arg10: memref<64x32xf32, #tpu.memory_space<vmem>>) attributes {dimension_semantics = [], scalar_prefetch = 0 : i64, scratch_operands = 1 : i64, tpu.core_type = #tpu.core_type<tc>} {
    %c0 = arith.constant 0 : index
    %c0_0 = arith.constant 0 : index
    %0 = vector.load %arg0[%c0, %c0_0] : memref<64x16xf32, #tpu.memory_space<vmem>>, vector<64x16xf32>
    %c0_1 = arith.constant 0 : index
    %c0_2 = arith.constant 0 : index
    %1 = vector.load %arg1[%c0_1, %c0_2] : memref<16x128xf32, #tpu.memory_space<vmem>>, vector<16x128xf32>
    %c0_3 = arith.constant 0 : index
    %c0_4 = arith.constant 0 : index
    %2 = vector.load %arg2[%c0_3, %c0_4] : memref<32x128xf32, #tpu.memory_space<vmem>>, vector<32x128xf32>
    %c0_5 = arith.constant 0 : index
    %c0_6 = arith.constant 0 : index
    %3 = vector.load %arg3[%c0_5, %c0_6] : memref<1x128xf32, #tpu.memory_space<vmem>>, vector<1x128xf32>
    %cst = arith.constant dense<0.000000e+00> : vector<64x128xf32>
    %4 = tpu.matmul %0, %1, %cst {dimension_numbers = #tpu.dot_dimension_numbers<[1], [0], [0], [1], [0, 0, 1, 1], [], []>} : vector<64x16xf32>, vector<16x128xf32>, vector<64x128xf32> -> vector<64x128xf32>
    %5 = vector.broadcast %3 : vector<1x128xf32> to vector<64x128xf32>
    %6 = arith.addf %4, %5 : vector<64x128xf32>
    %cst_7 = arith.constant 0.000000e+00 : f32
    %7 = vector.broadcast %cst_7 : f32 to vector<8x32xf32>
    %cst_8 = arith.constant 0.000000e+00 : f32
    %8 = vector.broadcast %cst_8 : f32 to vector<8x32xf32>
    %9 = vector.extract_strided_slice %6 {offsets = [0, 0], sizes = [8, 128], strides = [1, 1]} : vector<64x128xf32> to vector<8x128xf32>
    %cst_9 = arith.constant dense<0.000000e+00> : vector<8x128xf32>
    %10 = tpu.matmul %7, %2, %cst_9 {dimension_numbers = #tpu.dot_dimension_numbers<[1], [0], [0], [1], [0, 0, 1, 1], [], []>} : vector<8x32xf32>, vector<32x128xf32>, vector<8x128xf32> -> vector<8x128xf32>
    %11 = arith.addf %9, %10 : vector<8x128xf32>
    %12 = vector.extract_strided_slice %11 {offsets = [0, 0], sizes = [8, 32], strides = [1, 1]} : vector<8x128xf32> to vector<8x32xf32>
    %13 = arith.negf %12 : vector<8x32xf32>
    %14 = math.exp %13 : vector<8x32xf32>
    %cst_10 = arith.constant 1.000000e+00 : f32
    %15 = vector.broadcast %cst_10 : f32 to vector<8x32xf32>
    %16 = arith.addf %15, %14 : vector<8x32xf32>
    %17 = arith.divf %15, %16 : vector<8x32xf32>
    %18 = vector.extract_strided_slice %11 {offsets = [0, 32], sizes = [8, 32], strides = [1, 1]} : vector<8x128xf32> to vector<8x32xf32>
    %19 = arith.negf %18 : vector<8x32xf32>
    %20 = math.exp %19 : vector<8x32xf32>
    %cst_11 = arith.constant 1.000000e+00 : f32
    %21 = vector.broadcast %cst_11 : f32 to vector<8x32xf32>
    %22 = arith.addf %21, %20 : vector<8x32xf32>
    %23 = arith.divf %21, %22 : vector<8x32xf32>
    %24 = vector.extract_strided_slice %11 {offsets = [0, 64], sizes = [8, 32], strides = [1, 1]} : vector<8x128xf32> to vector<8x32xf32>
    %25 = math.tanh %24 : vector<8x32xf32>
    %26 = vector.extract_strided_slice %11 {offsets = [0, 96], sizes = [8, 32], strides = [1, 1]} : vector<8x128xf32> to vector<8x32xf32>
    %27 = arith.negf %26 : vector<8x32xf32>
    %28 = math.exp %27 : vector<8x32xf32>
    %cst_12 = arith.constant 1.000000e+00 : f32
    %29 = vector.broadcast %cst_12 : f32 to vector<8x32xf32>
    %30 = arith.addf %29, %28 : vector<8x32xf32>
    %31 = arith.divf %29, %30 : vector<8x32xf32>
    %32 = arith.mulf %23, %8 : vector<8x32xf32>
    %33 = arith.mulf %17, %25 : vector<8x32xf32>
    %34 = arith.addf %32, %33 : vector<8x32xf32>
    %35 = math.tanh %34 : vector<8x32xf32>
    %36 = arith.mulf %31, %35 : vector<8x32xf32>
    %c0_13 = arith.constant 0 : index
    %c0_14 = arith.constant 0 : index
    %37 = vector.load %arg10[%c0_13, %c0_14] : memref<64x32xf32, #tpu.memory_space<vmem>>, vector<8x32xf32>
    tpu.vector_store %arg10[%c0_13, %c0_14], %36 {strides = array<i32>} : memref<64x32xf32, #tpu.memory_space<vmem>>, vector<8x32xf32>,
    %38 = vector.extract_strided_slice %6 {offsets = [8, 0], sizes = [8, 128], strides = [1, 1]} : vector<64x128xf32> to vector<8x128xf32>
    %cst_15 = arith.constant dense<0.000000e+00> : vector<8x128xf32>
    %39 = tpu.matmul %36, %2, %cst_15 {dimension_numbers = #tpu.dot_dimension_numbers<[1], [0], [0], [1], [0, 0, 1, 1], [], []>} : vector<8x32xf32>, vector<32x128xf32>, vector<8x128xf32> -> vector<8x128xf32>
    %40 = arith.addf %38, %39 : vector<8x128xf32>
    %41 = vector.extract_strided_slice %40 {offsets = [0, 0], sizes = [8, 32], strides = [1, 1]} : vector<8x128xf32> to vector<8x32xf32>
    %42 = arith.negf %41 : vector<8x32xf32>
    %43 = math.exp %42 : vector<8x32xf32>
    %cst_16 = arith.constant 1.000000e+00 : f32
    %44 = vector.broadcast %cst_16 : f32 to vector<8x32xf32>
    %45 = arith.addf %44, %43 : vector<8x32xf32>
    %46 = arith.divf %44, %45 : vector<8x32xf32>
    %47 = vector.extract_strided_slice %40 {offsets = [0, 32], sizes = [8, 32], strides = [1, 1]} : vector<8x128xf32> to vector<8x32xf32>
    %48 = arith.negf %47 : vector<8x32xf32>
    %49 = math.exp %48 : vector<8x32xf32>
    %cst_17 = arith.constant 1.000000e+00 : f32
    %50 = vector.broadcast %cst_17 : f32 to vector<8x32xf32>
    %51 = arith.addf %50, %49 : vector<8x32xf32>
    %52 = arith.divf %50, %51 : vector<8x32xf32>
    %53 = vector.extract_strided_slice %40 {offsets = [0, 64], sizes = [8, 32], strides = [1, 1]} : vector<8x128xf32> to vector<8x32xf32>
    %54 = math.tanh %53 : vector<8x32xf32>
    %55 = vector.extract_strided_slice %40 {offsets = [0, 96], sizes = [8, 32], strides = [1, 1]} : vector<8x128xf32> to vector<8x32xf32>
    %56 = arith.negf %55 : vector<8x32xf32>
    %57 = math.exp %56 : vector<8x32xf32>
    %cst_18 = arith.constant 1.000000e+00 : f32
    %58 = vector.broadcast %cst_18 : f32 to vector<8x32xf32>
    %59 = arith.addf %58, %57 : vector<8x32xf32>
    %60 = arith.divf %58, %59 : vector<8x32xf32>
    %61 = arith.mulf %52, %34 : vector<8x32xf32>
    %62 = arith.mulf %46, %54 : vector<8x32xf32>
    %63 = arith.addf %61, %62 : vector<8x32xf32>
    %64 = math.tanh %63 : vector<8x32xf32>
    %65 = arith.mulf %60, %64 : vector<8x32xf32>
    %c8 = arith.constant 8 : index
    %c0_19 = arith.constant 0 : index
    %66 = vector.load %arg10[%c8, %c0_19] : memref<64x32xf32, #tpu.memory_space<vmem>>, vector<8x32xf32>
    tpu.vector_store %arg10[%c8, %c0_19], %65 {strides = array<i32>} : memref<64x32xf32, #tpu.memory_space<vmem>>, vector<8x32xf32>,
    %67 = vector.extract_strided_slice %6 {offsets = [16, 0], sizes = [8, 128], strides = [1, 1]} : vector<64x128xf32> to vector<8x128xf32>
    %cst_20 = arith.constant dense<0.000000e+00> : vector<8x128xf32>
    %68 = tpu.matmul %65, %2, %cst_20 {dimension_numbers = #tpu.dot_dimension_numbers<[1], [0], [0], [1], [0, 0, 1, 1], [], []>} : vector<8x32xf32>, vector<32x128xf32>, vector<8x128xf32> -> vector<8x128xf32>
    %69 = arith.addf %67, %68 : vector<8x128xf32>
    %70 = vector.extract_strided_slice %69 {offsets = [0, 0], sizes = [8, 32], strides = [1, 1]} : vector<8x128xf32> to vector<8x32xf32>
    %71 = arith.negf %70 : vector<8x32xf32>
    %72 = math.exp %71 : vector<8x32xf32>
    %cst_21 = arith.constant 1.000000e+00 : f32
    %73 = vector.broadcast %cst_21 : f32 to vector<8x32xf32>
    %74 = arith.addf %73, %72 : vector<8x32xf32>
    %75 = arith.divf %73, %74 : vector<8x32xf32>
    %76 = vector.extract_strided_slice %69 {offsets = [0, 32], sizes = [8, 32], strides = [1, 1]} : vector<8x128xf32> to vector<8x32xf32>
    %77 = arith.negf %76 : vector<8x32xf32>
    %78 = math.exp %77 : vector<8x32xf32>
    %cst_22 = arith.constant 1.000000e+00 : f32
    %79 = vector.broadcast %cst_22 : f32 to vector<8x32xf32>
    %80 = arith.addf %79, %78 : vector<8x32xf32>
    %81 = arith.divf %79, %80 : vector<8x32xf32>
    %82 = vector.extract_strided_slice %69 {offsets = [0, 64], sizes = [8, 32], strides = [1, 1]} : vector<8x128xf32> to vector<8x32xf32>
    %83 = math.tanh %82 : vector<8x32xf32>
    %84 = vector.extract_strided_slice %69 {offsets = [0, 96], sizes = [8, 32], strides = [1, 1]} : vector<8x128xf32> to vector<8x32xf32>
    %85 = arith.negf %84 : vector<8x32xf32>
    %86 = math.exp %85 : vector<8x32xf32>
    %cst_23 = arith.constant 1.000000e+00 : f32
    %87 = vector.broadcast %cst_23 : f32 to vector<8x32xf32>
    %88 = arith.addf %87, %86 : vector<8x32xf32>
    %89 = arith.divf %87, %88 : vector<8x32xf32>
    %90 = arith.mulf %81, %63 : vector<8x32xf32>
    %91 = arith.mulf %75, %83 : vector<8x32xf32>
    %92 = arith.addf %90, %91 : vector<8x32xf32>
    %93 = math.tanh %92 : vector<8x32xf32>
    %94 = arith.mulf %89, %93 : vector<8x32xf32>
    %c16 = arith.constant 16 : index
    %c0_24 = arith.constant 0 : index
    %95 = vector.load %arg10[%c16, %c0_24] : memref<64x32xf32, #tpu.memory_space<vmem>>, vector<8x32xf32>
    tpu.vector_store %arg10[%c16, %c0_24], %94 {strides = array<i32>} : memref<64x32xf32, #tpu.memory_space<vmem>>, vector<8x32xf32>,
    %96 = vector.extract_strided_slice %6 {offsets = [24, 0], sizes = [8, 128], strides = [1, 1]} : vector<64x128xf32> to vector<8x128xf32>
    %cst_25 = arith.constant dense<0.000000e+00> : vector<8x128xf32>
    %97 = tpu.matmul %94, %2, %cst_25 {dimension_numbers = #tpu.dot_dimension_numbers<[1], [0], [0], [1], [0, 0, 1, 1], [], []>} : vector<8x32xf32>, vector<32x128xf32>, vector<8x128xf32> -> vector<8x128xf32>
    %98 = arith.addf %96, %97 : vector<8x128xf32>
    %99 = vector.extract_strided_slice %98 {offsets = [0, 0], sizes = [8, 32], strides = [1, 1]} : vector<8x128xf32> to vector<8x32xf32>
    %100 = arith.negf %99 : vector<8x32xf32>
    %101 = math.exp %100 : vector<8x32xf32>
    %cst_26 = arith.constant 1.000000e+00 : f32
    %102 = vector.broadcast %cst_26 : f32 to vector<8x32xf32>
    %103 = arith.addf %102, %101 : vector<8x32xf32>
    %104 = arith.divf %102, %103 : vector<8x32xf32>
    %105 = vector.extract_strided_slice %98 {offsets = [0, 32], sizes = [8, 32], strides = [1, 1]} : vector<8x128xf32> to vector<8x32xf32>
    %106 = arith.negf %105 : vector<8x32xf32>
    %107 = math.exp %106 : vector<8x32xf32>
    %cst_27 = arith.constant 1.000000e+00 : f32
    %108 = vector.broadcast %cst_27 : f32 to vector<8x32xf32>
    %109 = arith.addf %108, %107 : vector<8x32xf32>
    %110 = arith.divf %108, %109 : vector<8x32xf32>
    %111 = vector.extract_strided_slice %98 {offsets = [0, 64], sizes = [8, 32], strides = [1, 1]} : vector<8x128xf32> to vector<8x32xf32>
    %112 = math.tanh %111 : vector<8x32xf32>
    %113 = vector.extract_strided_slice %98 {offsets = [0, 96], sizes = [8, 32], strides = [1, 1]} : vector<8x128xf32> to vector<8x32xf32>
    %114 = arith.negf %113 : vector<8x32xf32>
    %115 = math.exp %114 : vector<8x32xf32>
    %cst_28 = arith.constant 1.000000e+00 : f32
    %116 = vector.broadcast %cst_28 : f32 to vector<8x32xf32>
    %117 = arith.addf %116, %115 : vector<8x32xf32>
    %118 = arith.divf %116, %117 : vector<8x32xf32>
    %119 = arith.mulf %110, %92 : vector<8x32xf32>
    %120 = arith.mulf %104, %112 : vector<8x32xf32>
    %121 = arith.addf %119, %120 : vector<8x32xf32>
    %122 = math.tanh %121 : vector<8x32xf32>
    %123 = arith.mulf %118, %122 : vector<8x32xf32>
    %c24 = arith.constant 24 : index
    %c0_29 = arith.constant 0 : index
    %124 = vector.load %arg10[%c24, %c0_29] : memref<64x32xf32, #tpu.memory_space<vmem>>, vector<8x32xf32>
    tpu.vector_store %arg10[%c24, %c0_29], %123 {strides = array<i32>} : memref<64x32xf32, #tpu.memory_space<vmem>>, vector<8x32xf32>,
    %125 = vector.extract_strided_slice %6 {offsets = [32, 0], sizes = [8, 128], strides = [1, 1]} : vector<64x128xf32> to vector<8x128xf32>
    %cst_30 = arith.constant dense<0.000000e+00> : vector<8x128xf32>
    %126 = tpu.matmul %123, %2, %cst_30 {dimension_numbers = #tpu.dot_dimension_numbers<[1], [0], [0], [1], [0, 0, 1, 1], [], []>} : vector<8x32xf32>, vector<32x128xf32>, vector<8x128xf32> -> vector<8x128xf32>
    %127 = arith.addf %125, %126 : vector<8x128xf32>
    %128 = vector.extract_strided_slice %127 {offsets = [0, 0], sizes = [8, 32], strides = [1, 1]} : vector<8x128xf32> to vector<8x32xf32>
    %129 = arith.negf %128 : vector<8x32xf32>
    %130 = math.exp %129 : vector<8x32xf32>
    %cst_31 = arith.constant 1.000000e+00 : f32
    %131 = vector.broadcast %cst_31 : f32 to vector<8x32xf32>
    %132 = arith.addf %131, %130 : vector<8x32xf32>
    %133 = arith.divf %131, %132 : vector<8x32xf32>
    %134 = vector.extract_strided_slice %127 {offsets = [0, 32], sizes = [8, 32], strides = [1, 1]} : vector<8x128xf32> to vector<8x32xf32>
    %135 = arith.negf %134 : vector<8x32xf32>
    %136 = math.exp %135 : vector<8x32xf32>
    %cst_32 = arith.constant 1.000000e+00 : f32
    %137 = vector.broadcast %cst_32 : f32 to vector<8x32xf32>
    %138 = arith.addf %137, %136 : vector<8x32xf32>
    %139 = arith.divf %137, %138 : vector<8x32xf32>
    %140 = vector.extract_strided_slice %127 {offsets = [0, 64], sizes = [8, 32], strides = [1, 1]} : vector<8x128xf32> to vector<8x32xf32>
    %141 = math.tanh %140 : vector<8x32xf32>
    %142 = vector.extract_strided_slice %127 {offsets = [0, 96], sizes = [8, 32], strides = [1, 1]} : vector<8x128xf32> to vector<8x32xf32>
    %143 = arith.negf %142 : vector<8x32xf32>
    %144 = math.exp %143 : vector<8x32xf32>
    %cst_33 = arith.constant 1.000000e+00 : f32
    %145 = vector.broadcast %cst_33 : f32 to vector<8x32xf32>
    %146 = arith.addf %145, %144 : vector<8x32xf32>
    %147 = arith.divf %145, %146 : vector<8x32xf32>
    %148 = arith.mulf %139, %121 : vector<8x32xf32>
    %149 = arith.mulf %133, %141 : vector<8x32xf32>
    %150 = arith.addf %148, %149 : vector<8x32xf32>
    %151 = math.tanh %150 : vector<8x32xf32>
    %152 = arith.mulf %147, %151 : vector<8x32xf32>
    %c32 = arith.constant 32 : index
    %c0_34 = arith.constant 0 : index
    %153 = vector.load %arg10[%c32, %c0_34] : memref<64x32xf32, #tpu.memory_space<vmem>>, vector<8x32xf32>
    tpu.vector_store %arg10[%c32, %c0_34], %152 {strides = array<i32>} : memref<64x32xf32, #tpu.memory_space<vmem>>, vector<8x32xf32>,
    %154 = vector.extract_strided_slice %6 {offsets = [40, 0], sizes = [8, 128], strides = [1, 1]} : vector<64x128xf32> to vector<8x128xf32>
    %cst_35 = arith.constant dense<0.000000e+00> : vector<8x128xf32>
    %155 = tpu.matmul %152, %2, %cst_35 {dimension_numbers = #tpu.dot_dimension_numbers<[1], [0], [0], [1], [0, 0, 1, 1], [], []>} : vector<8x32xf32>, vector<32x128xf32>, vector<8x128xf32> -> vector<8x128xf32>
    %156 = arith.addf %154, %155 : vector<8x128xf32>
    %157 = vector.extract_strided_slice %156 {offsets = [0, 0], sizes = [8, 32], strides = [1, 1]} : vector<8x128xf32> to vector<8x32xf32>
    %158 = arith.negf %157 : vector<8x32xf32>
    %159 = math.exp %158 : vector<8x32xf32>
    %cst_36 = arith.constant 1.000000e+00 : f32
    %160 = vector.broadcast %cst_36 : f32 to vector<8x32xf32>
    %161 = arith.addf %160, %159 : vector<8x32xf32>
    %162 = arith.divf %160, %161 : vector<8x32xf32>
    %163 = vector.extract_strided_slice %156 {offsets = [0, 32], sizes = [8, 32], strides = [1, 1]} : vector<8x128xf32> to vector<8x32xf32>
    %164 = arith.negf %163 : vector<8x32xf32>
    %165 = math.exp %164 : vector<8x32xf32>
    %cst_37 = arith.constant 1.000000e+00 : f32
    %166 = vector.broadcast %cst_37 : f32 to vector<8x32xf32>
    %167 = arith.addf %166, %165 : vector<8x32xf32>
    %168 = arith.divf %166, %167 : vector<8x32xf32>
    %169 = vector.extract_strided_slice %156 {offsets = [0, 64], sizes = [8, 32], strides = [1, 1]} : vector<8x128xf32> to vector<8x32xf32>
    %170 = math.tanh %169 : vector<8x32xf32>
    %171 = vector.extract_strided_slice %156 {offsets = [0, 96], sizes = [8, 32], strides = [1, 1]} : vector<8x128xf32> to vector<8x32xf32>
    %172 = arith.negf %171 : vector<8x32xf32>
    %173 = math.exp %172 : vector<8x32xf32>
    %cst_38 = arith.constant 1.000000e+00 : f32
    %174 = vector.broadcast %cst_38 : f32 to vector<8x32xf32>
    %175 = arith.addf %174, %173 : vector<8x32xf32>
    %176 = arith.divf %174, %175 : vector<8x32xf32>
    %177 = arith.mulf %168, %150 : vector<8x32xf32>
    %178 = arith.mulf %162, %170 : vector<8x32xf32>
    %179 = arith.addf %177, %178 : vector<8x32xf32>
    %180 = math.tanh %179 : vector<8x32xf32>
    %181 = arith.mulf %176, %180 : vector<8x32xf32>
    %c40 = arith.constant 40 : index
    %c0_39 = arith.constant 0 : index
    %182 = vector.load %arg10[%c40, %c0_39] : memref<64x32xf32, #tpu.memory_space<vmem>>, vector<8x32xf32>
    tpu.vector_store %arg10[%c40, %c0_39], %181 {strides = array<i32>} : memref<64x32xf32, #tpu.memory_space<vmem>>, vector<8x32xf32>,
    %183 = vector.extract_strided_slice %6 {offsets = [48, 0], sizes = [8, 128], strides = [1, 1]} : vector<64x128xf32> to vector<8x128xf32>
    %cst_40 = arith.constant dense<0.000000e+00> : vector<8x128xf32>
    %184 = tpu.matmul %181, %2, %cst_40 {dimension_numbers = #tpu.dot_dimension_numbers<[1], [0], [0], [1], [0, 0, 1, 1], [], []>} : vector<8x32xf32>, vector<32x128xf32>, vector<8x128xf32> -> vector<8x128xf32>
    %185 = arith.addf %183, %184 : vector<8x128xf32>
    %186 = vector.extract_strided_slice %185 {offsets = [0, 0], sizes = [8, 32], strides = [1, 1]} : vector<8x128xf32> to vector<8x32xf32>
    %187 = arith.negf %186 : vector<8x32xf32>
    %188 = math.exp %187 : vector<8x32xf32>
    %cst_41 = arith.constant 1.000000e+00 : f32
    %189 = vector.broadcast %cst_41 : f32 to vector<8x32xf32>
    %190 = arith.addf %189, %188 : vector<8x32xf32>
    %191 = arith.divf %189, %190 : vector<8x32xf32>
    %192 = vector.extract_strided_slice %185 {offsets = [0, 32], sizes = [8, 32], strides = [1, 1]} : vector<8x128xf32> to vector<8x32xf32>
    %193 = arith.negf %192 : vector<8x32xf32>
    %194 = math.exp %193 : vector<8x32xf32>
    %cst_42 = arith.constant 1.000000e+00 : f32
    %195 = vector.broadcast %cst_42 : f32 to vector<8x32xf32>
    %196 = arith.addf %195, %194 : vector<8x32xf32>
    %197 = arith.divf %195, %196 : vector<8x32xf32>
    %198 = vector.extract_strided_slice %185 {offsets = [0, 64], sizes = [8, 32], strides = [1, 1]} : vector<8x128xf32> to vector<8x32xf32>
    %199 = math.tanh %198 : vector<8x32xf32>
    %200 = vector.extract_strided_slice %185 {offsets = [0, 96], sizes = [8, 32], strides = [1, 1]} : vector<8x128xf32> to vector<8x32xf32>
    %201 = arith.negf %200 : vector<8x32xf32>
    %202 = math.exp %201 : vector<8x32xf32>
    %cst_43 = arith.constant 1.000000e+00 : f32
    %203 = vector.broadcast %cst_43 : f32 to vector<8x32xf32>
    %204 = arith.addf %203, %202 : vector<8x32xf32>
    %205 = arith.divf %203, %204 : vector<8x32xf32>
    %206 = arith.mulf %197, %179 : vector<8x32xf32>
    %207 = arith.mulf %191, %199 : vector<8x32xf32>
    %208 = arith.addf %206, %207 : vector<8x32xf32>
    %209 = math.tanh %208 : vector<8x32xf32>
    %210 = arith.mulf %205, %209 : vector<8x32xf32>
    %c48 = arith.constant 48 : index
    %c0_44 = arith.constant 0 : index
    %211 = vector.load %arg10[%c48, %c0_44] : memref<64x32xf32, #tpu.memory_space<vmem>>, vector<8x32xf32>
    tpu.vector_store %arg10[%c48, %c0_44], %210 {strides = array<i32>} : memref<64x32xf32, #tpu.memory_space<vmem>>, vector<8x32xf32>,
    %212 = vector.extract_strided_slice %6 {offsets = [56, 0], sizes = [8, 128], strides = [1, 1]} : vector<64x128xf32> to vector<8x128xf32>
    %cst_45 = arith.constant dense<0.000000e+00> : vector<8x128xf32>
    %213 = tpu.matmul %210, %2, %cst_45 {dimension_numbers = #tpu.dot_dimension_numbers<[1], [0], [0], [1], [0, 0, 1, 1], [], []>} : vector<8x32xf32>, vector<32x128xf32>, vector<8x128xf32> -> vector<8x128xf32>
    %214 = arith.addf %212, %213 : vector<8x128xf32>
    %215 = vector.extract_strided_slice %214 {offsets = [0, 0], sizes = [8, 32], strides = [1, 1]} : vector<8x128xf32> to vector<8x32xf32>
    %216 = arith.negf %215 : vector<8x32xf32>
    %217 = math.exp %216 : vector<8x32xf32>
    %cst_46 = arith.constant 1.000000e+00 : f32
    %218 = vector.broadcast %cst_46 : f32 to vector<8x32xf32>
    %219 = arith.addf %218, %217 : vector<8x32xf32>
    %220 = arith.divf %218, %219 : vector<8x32xf32>
    %221 = vector.extract_strided_slice %214 {offsets = [0, 32], sizes = [8, 32], strides = [1, 1]} : vector<8x128xf32> to vector<8x32xf32>
    %222 = arith.negf %221 : vector<8x32xf32>
    %223 = math.exp %222 : vector<8x32xf32>
    %cst_47 = arith.constant 1.000000e+00 : f32
    %224 = vector.broadcast %cst_47 : f32 to vector<8x32xf32>
    %225 = arith.addf %224, %223 : vector<8x32xf32>
    %226 = arith.divf %224, %225 : vector<8x32xf32>
    %227 = vector.extract_strided_slice %214 {offsets = [0, 64], sizes = [8, 32], strides = [1, 1]} : vector<8x128xf32> to vector<8x32xf32>
    %228 = math.tanh %227 : vector<8x32xf32>
    %229 = vector.extract_strided_slice %214 {offsets = [0, 96], sizes = [8, 32], strides = [1, 1]} : vector<8x128xf32> to vector<8x32xf32>
    %230 = arith.negf %229 : vector<8x32xf32>
    %231 = math.exp %230 : vector<8x32xf32>
    %cst_48 = arith.constant 1.000000e+00 : f32
    %232 = vector.broadcast %cst_48 : f32 to vector<8x32xf32>
    %233 = arith.addf %232, %231 : vector<8x32xf32>
    %234 = arith.divf %232, %233 : vector<8x32xf32>
    %235 = arith.mulf %226, %208 : vector<8x32xf32>
    %236 = arith.mulf %220, %228 : vector<8x32xf32>
    %237 = arith.addf %235, %236 : vector<8x32xf32>
    %238 = math.tanh %237 : vector<8x32xf32>
    %239 = arith.mulf %234, %238 : vector<8x32xf32>
    %c56 = arith.constant 56 : index
    %c0_49 = arith.constant 0 : index
    %240 = vector.load %arg10[%c56, %c0_49] : memref<64x32xf32, #tpu.memory_space<vmem>>, vector<8x32xf32>
    tpu.vector_store %arg10[%c56, %c0_49], %239 {strides = array<i32>} : memref<64x32xf32, #tpu.memory_space<vmem>>, vector<8x32xf32>,
    %c0_50 = arith.constant 0 : index
    %c0_51 = arith.constant 0 : index
    %241 = vector.load %arg10[%c0_50, %c0_51] : memref<64x32xf32, #tpu.memory_space<vmem>>, vector<64x32xf32>
    %c0_52 = arith.constant 0 : index
    %c0_53 = arith.constant 0 : index
    %242 = vector.load %arg4[%c0_52, %c0_53] : memref<32x128xf32, #tpu.memory_space<vmem>>, vector<32x128xf32>
    %c0_54 = arith.constant 0 : index
    %c0_55 = arith.constant 0 : index
    %243 = vector.load %arg5[%c0_54, %c0_55] : memref<32x128xf32, #tpu.memory_space<vmem>>, vector<32x128xf32>
    %c0_56 = arith.constant 0 : index
    %c0_57 = arith.constant 0 : index
    %244 = vector.load %arg6[%c0_56, %c0_57] : memref<1x128xf32, #tpu.memory_space<vmem>>, vector<1x128xf32>
    %cst_58 = arith.constant dense<0.000000e+00> : vector<64x128xf32>
    %245 = tpu.matmul %241, %242, %cst_58 {dimension_numbers = #tpu.dot_dimension_numbers<[1], [0], [0], [1], [0, 0, 1, 1], [], []>} : vector<64x32xf32>, vector<32x128xf32>, vector<64x128xf32> -> vector<64x128xf32>
    %246 = vector.broadcast %244 : vector<1x128xf32> to vector<64x128xf32>
    %247 = arith.addf %245, %246 : vector<64x128xf32>
    %cst_59 = arith.constant 0.000000e+00 : f32
    %248 = vector.broadcast %cst_59 : f32 to vector<8x32xf32>
    %cst_60 = arith.constant 0.000000e+00 : f32
    %249 = vector.broadcast %cst_60 : f32 to vector<8x32xf32>
    %250 = vector.extract_strided_slice %247 {offsets = [0, 0], sizes = [8, 128], strides = [1, 1]} : vector<64x128xf32> to vector<8x128xf32>
    %cst_61 = arith.constant dense<0.000000e+00> : vector<8x128xf32>
    %251 = tpu.matmul %248, %243, %cst_61 {dimension_numbers = #tpu.dot_dimension_numbers<[1], [0], [0], [1], [0, 0, 1, 1], [], []>} : vector<8x32xf32>, vector<32x128xf32>, vector<8x128xf32> -> vector<8x128xf32>
    %252 = arith.addf %250, %251 : vector<8x128xf32>
    %253 = vector.extract_strided_slice %252 {offsets = [0, 0], sizes = [8, 32], strides = [1, 1]} : vector<8x128xf32> to vector<8x32xf32>
    %254 = arith.negf %253 : vector<8x32xf32>
    %255 = math.exp %254 : vector<8x32xf32>
    %cst_62 = arith.constant 1.000000e+00 : f32
    %256 = vector.broadcast %cst_62 : f32 to vector<8x32xf32>
    %257 = arith.addf %256, %255 : vector<8x32xf32>
    %258 = arith.divf %256, %257 : vector<8x32xf32>
    %259 = vector.extract_strided_slice %252 {offsets = [0, 32], sizes = [8, 32], strides = [1, 1]} : vector<8x128xf32> to vector<8x32xf32>
    %260 = arith.negf %259 : vector<8x32xf32>
    %261 = math.exp %260 : vector<8x32xf32>
    %cst_63 = arith.constant 1.000000e+00 : f32
    %262 = vector.broadcast %cst_63 : f32 to vector<8x32xf32>
    %263 = arith.addf %262, %261 : vector<8x32xf32>
    %264 = arith.divf %262, %263 : vector<8x32xf32>
    %265 = vector.extract_strided_slice %252 {offsets = [0, 64], sizes = [8, 32], strides = [1, 1]} : vector<8x128xf32> to vector<8x32xf32>
    %266 = math.tanh %265 : vector<8x32xf32>
    %267 = vector.extract_strided_slice %252 {offsets = [0, 96], sizes = [8, 32], strides = [1, 1]} : vector<8x128xf32> to vector<8x32xf32>
    %268 = arith.negf %267 : vector<8x32xf32>
    %269 = math.exp %268 : vector<8x32xf32>
    %cst_64 = arith.constant 1.000000e+00 : f32
    %270 = vector.broadcast %cst_64 : f32 to vector<8x32xf32>
    %271 = arith.addf %270, %269 : vector<8x32xf32>
    %272 = arith.divf %270, %271 : vector<8x32xf32>
    %273 = arith.mulf %264, %249 : vector<8x32xf32>
    %274 = arith.mulf %258, %266 : vector<8x32xf32>
    %275 = arith.addf %273, %274 : vector<8x32xf32>
    %276 = math.tanh %275 : vector<8x32xf32>
    %277 = arith.mulf %272, %276 : vector<8x32xf32>
    %278 = vector.extract_strided_slice %247 {offsets = [8, 0], sizes = [8, 128], strides = [1, 1]} : vector<64x128xf32> to vector<8x128xf32>
    %cst_65 = arith.constant dense<0.000000e+00> : vector<8x128xf32>
    %279 = tpu.matmul %277, %243, %cst_65 {dimension_numbers = #tpu.dot_dimension_numbers<[1], [0], [0], [1], [0, 0, 1, 1], [], []>} : vector<8x32xf32>, vector<32x128xf32>, vector<8x128xf32> -> vector<8x128xf32>
    %280 = arith.addf %278, %279 : vector<8x128xf32>
    %281 = vector.extract_strided_slice %280 {offsets = [0, 0], sizes = [8, 32], strides = [1, 1]} : vector<8x128xf32> to vector<8x32xf32>
    %282 = arith.negf %281 : vector<8x32xf32>
    %283 = math.exp %282 : vector<8x32xf32>
    %cst_66 = arith.constant 1.000000e+00 : f32
    %284 = vector.broadcast %cst_66 : f32 to vector<8x32xf32>
    %285 = arith.addf %284, %283 : vector<8x32xf32>
    %286 = arith.divf %284, %285 : vector<8x32xf32>
    %287 = vector.extract_strided_slice %280 {offsets = [0, 32], sizes = [8, 32], strides = [1, 1]} : vector<8x128xf32> to vector<8x32xf32>
    %288 = arith.negf %287 : vector<8x32xf32>
    %289 = math.exp %288 : vector<8x32xf32>
    %cst_67 = arith.constant 1.000000e+00 : f32
    %290 = vector.broadcast %cst_67 : f32 to vector<8x32xf32>
    %291 = arith.addf %290, %289 : vector<8x32xf32>
    %292 = arith.divf %290, %291 : vector<8x32xf32>
    %293 = vector.extract_strided_slice %280 {offsets = [0, 64], sizes = [8, 32], strides = [1, 1]} : vector<8x128xf32> to vector<8x32xf32>
    %294 = math.tanh %293 : vector<8x32xf32>
    %295 = vector.extract_strided_slice %280 {offsets = [0, 96], sizes = [8, 32], strides = [1, 1]} : vector<8x128xf32> to vector<8x32xf32>
    %296 = arith.negf %295 : vector<8x32xf32>
    %297 = math.exp %296 : vector<8x32xf32>
    %cst_68 = arith.constant 1.000000e+00 : f32
    %298 = vector.broadcast %cst_68 : f32 to vector<8x32xf32>
    %299 = arith.addf %298, %297 : vector<8x32xf32>
    %300 = arith.divf %298, %299 : vector<8x32xf32>
    %301 = arith.mulf %292, %275 : vector<8x32xf32>
    %302 = arith.mulf %286, %294 : vector<8x32xf32>
    %303 = arith.addf %301, %302 : vector<8x32xf32>
    %304 = math.tanh %303 : vector<8x32xf32>
    %305 = arith.mulf %300, %304 : vector<8x32xf32>
    %306 = vector.extract_strided_slice %247 {offsets = [16, 0], sizes = [8, 128], strides = [1, 1]} : vector<64x128xf32> to vector<8x128xf32>
    %cst_69 = arith.constant dense<0.000000e+00> : vector<8x128xf32>
    %307 = tpu.matmul %305, %243, %cst_69 {dimension_numbers = #tpu.dot_dimension_numbers<[1], [0], [0], [1], [0, 0, 1, 1], [], []>} : vector<8x32xf32>, vector<32x128xf32>, vector<8x128xf32> -> vector<8x128xf32>
    %308 = arith.addf %306, %307 : vector<8x128xf32>
    %309 = vector.extract_strided_slice %308 {offsets = [0, 0], sizes = [8, 32], strides = [1, 1]} : vector<8x128xf32> to vector<8x32xf32>
    %310 = arith.negf %309 : vector<8x32xf32>
    %311 = math.exp %310 : vector<8x32xf32>
    %cst_70 = arith.constant 1.000000e+00 : f32
    %312 = vector.broadcast %cst_70 : f32 to vector<8x32xf32>
    %313 = arith.addf %312, %311 : vector<8x32xf32>
    %314 = arith.divf %312, %313 : vector<8x32xf32>
    %315 = vector.extract_strided_slice %308 {offsets = [0, 32], sizes = [8, 32], strides = [1, 1]} : vector<8x128xf32> to vector<8x32xf32>
    %316 = arith.negf %315 : vector<8x32xf32>
    %317 = math.exp %316 : vector<8x32xf32>
    %cst_71 = arith.constant 1.000000e+00 : f32
    %318 = vector.broadcast %cst_71 : f32 to vector<8x32xf32>
    %319 = arith.addf %318, %317 : vector<8x32xf32>
    %320 = arith.divf %318, %319 : vector<8x32xf32>
    %321 = vector.extract_strided_slice %308 {offsets = [0, 64], sizes = [8, 32], strides = [1, 1]} : vector<8x128xf32> to vector<8x32xf32>
    %322 = math.tanh %321 : vector<8x32xf32>
    %323 = vector.extract_strided_slice %308 {offsets = [0, 96], sizes = [8, 32], strides = [1, 1]} : vector<8x128xf32> to vector<8x32xf32>
    %324 = arith.negf %323 : vector<8x32xf32>
    %325 = math.exp %324 : vector<8x32xf32>
    %cst_72 = arith.constant 1.000000e+00 : f32
    %326 = vector.broadcast %cst_72 : f32 to vector<8x32xf32>
    %327 = arith.addf %326, %325 : vector<8x32xf32>
    %328 = arith.divf %326, %327 : vector<8x32xf32>
    %329 = arith.mulf %320, %303 : vector<8x32xf32>
    %330 = arith.mulf %314, %322 : vector<8x32xf32>
    %331 = arith.addf %329, %330 : vector<8x32xf32>
    %332 = math.tanh %331 : vector<8x32xf32>
    %333 = arith.mulf %328, %332 : vector<8x32xf32>
    %334 = vector.extract_strided_slice %247 {offsets = [24, 0], sizes = [8, 128], strides = [1, 1]} : vector<64x128xf32> to vector<8x128xf32>
    %cst_73 = arith.constant dense<0.000000e+00> : vector<8x128xf32>
    %335 = tpu.matmul %333, %243, %cst_73 {dimension_numbers = #tpu.dot_dimension_numbers<[1], [0], [0], [1], [0, 0, 1, 1], [], []>} : vector<8x32xf32>, vector<32x128xf32>, vector<8x128xf32> -> vector<8x128xf32>
    %336 = arith.addf %334, %335 : vector<8x128xf32>
    %337 = vector.extract_strided_slice %336 {offsets = [0, 0], sizes = [8, 32], strides = [1, 1]} : vector<8x128xf32> to vector<8x32xf32>
    %338 = arith.negf %337 : vector<8x32xf32>
    %339 = math.exp %338 : vector<8x32xf32>
    %cst_74 = arith.constant 1.000000e+00 : f32
    %340 = vector.broadcast %cst_74 : f32 to vector<8x32xf32>
    %341 = arith.addf %340, %339 : vector<8x32xf32>
    %342 = arith.divf %340, %341 : vector<8x32xf32>
    %343 = vector.extract_strided_slice %336 {offsets = [0, 32], sizes = [8, 32], strides = [1, 1]} : vector<8x128xf32> to vector<8x32xf32>
    %344 = arith.negf %343 : vector<8x32xf32>
    %345 = math.exp %344 : vector<8x32xf32>
    %cst_75 = arith.constant 1.000000e+00 : f32
    %346 = vector.broadcast %cst_75 : f32 to vector<8x32xf32>
    %347 = arith.addf %346, %345 : vector<8x32xf32>
    %348 = arith.divf %346, %347 : vector<8x32xf32>
    %349 = vector.extract_strided_slice %336 {offsets = [0, 64], sizes = [8, 32], strides = [1, 1]} : vector<8x128xf32> to vector<8x32xf32>
    %350 = math.tanh %349 : vector<8x32xf32>
    %351 = vector.extract_strided_slice %336 {offsets = [0, 96], sizes = [8, 32], strides = [1, 1]} : vector<8x128xf32> to vector<8x32xf32>
    %352 = arith.negf %351 : vector<8x32xf32>
    %353 = math.exp %352 : vector<8x32xf32>
    %cst_76 = arith.constant 1.000000e+00 : f32
    %354 = vector.broadcast %cst_76 : f32 to vector<8x32xf32>
    %355 = arith.addf %354, %353 : vector<8x32xf32>
    %356 = arith.divf %354, %355 : vector<8x32xf32>
    %357 = arith.mulf %348, %331 : vector<8x32xf32>
    %358 = arith.mulf %342, %350 : vector<8x32xf32>
    %359 = arith.addf %357, %358 : vector<8x32xf32>
    %360 = math.tanh %359 : vector<8x32xf32>
    %361 = arith.mulf %356, %360 : vector<8x32xf32>
    %362 = vector.extract_strided_slice %247 {offsets = [32, 0], sizes = [8, 128], strides = [1, 1]} : vector<64x128xf32> to vector<8x128xf32>
    %cst_77 = arith.constant dense<0.000000e+00> : vector<8x128xf32>
    %363 = tpu.matmul %361, %243, %cst_77 {dimension_numbers = #tpu.dot_dimension_numbers<[1], [0], [0], [1], [0, 0, 1, 1], [], []>} : vector<8x32xf32>, vector<32x128xf32>, vector<8x128xf32> -> vector<8x128xf32>
    %364 = arith.addf %362, %363 : vector<8x128xf32>
    %365 = vector.extract_strided_slice %364 {offsets = [0, 0], sizes = [8, 32], strides = [1, 1]} : vector<8x128xf32> to vector<8x32xf32>
    %366 = arith.negf %365 : vector<8x32xf32>
    %367 = math.exp %366 : vector<8x32xf32>
    %cst_78 = arith.constant 1.000000e+00 : f32
    %368 = vector.broadcast %cst_78 : f32 to vector<8x32xf32>
    %369 = arith.addf %368, %367 : vector<8x32xf32>
    %370 = arith.divf %368, %369 : vector<8x32xf32>
    %371 = vector.extract_strided_slice %364 {offsets = [0, 32], sizes = [8, 32], strides = [1, 1]} : vector<8x128xf32> to vector<8x32xf32>
    %372 = arith.negf %371 : vector<8x32xf32>
    %373 = math.exp %372 : vector<8x32xf32>
    %cst_79 = arith.constant 1.000000e+00 : f32
    %374 = vector.broadcast %cst_79 : f32 to vector<8x32xf32>
    %375 = arith.addf %374, %373 : vector<8x32xf32>
    %376 = arith.divf %374, %375 : vector<8x32xf32>
    %377 = vector.extract_strided_slice %364 {offsets = [0, 64], sizes = [8, 32], strides = [1, 1]} : vector<8x128xf32> to vector<8x32xf32>
    %378 = math.tanh %377 : vector<8x32xf32>
    %379 = vector.extract_strided_slice %364 {offsets = [0, 96], sizes = [8, 32], strides = [1, 1]} : vector<8x128xf32> to vector<8x32xf32>
    %380 = arith.negf %379 : vector<8x32xf32>
    %381 = math.exp %380 : vector<8x32xf32>
    %cst_80 = arith.constant 1.000000e+00 : f32
    %382 = vector.broadcast %cst_80 : f32 to vector<8x32xf32>
    %383 = arith.addf %382, %381 : vector<8x32xf32>
    %384 = arith.divf %382, %383 : vector<8x32xf32>
    %385 = arith.mulf %376, %359 : vector<8x32xf32>
    %386 = arith.mulf %370, %378 : vector<8x32xf32>
    %387 = arith.addf %385, %386 : vector<8x32xf32>
    %388 = math.tanh %387 : vector<8x32xf32>
    %389 = arith.mulf %384, %388 : vector<8x32xf32>
    %390 = vector.extract_strided_slice %247 {offsets = [40, 0], sizes = [8, 128], strides = [1, 1]} : vector<64x128xf32> to vector<8x128xf32>
    %cst_81 = arith.constant dense<0.000000e+00> : vector<8x128xf32>
    %391 = tpu.matmul %389, %243, %cst_81 {dimension_numbers = #tpu.dot_dimension_numbers<[1], [0], [0], [1], [0, 0, 1, 1], [], []>} : vector<8x32xf32>, vector<32x128xf32>, vector<8x128xf32> -> vector<8x128xf32>
    %392 = arith.addf %390, %391 : vector<8x128xf32>
    %393 = vector.extract_strided_slice %392 {offsets = [0, 0], sizes = [8, 32], strides = [1, 1]} : vector<8x128xf32> to vector<8x32xf32>
    %394 = arith.negf %393 : vector<8x32xf32>
    %395 = math.exp %394 : vector<8x32xf32>
    %cst_82 = arith.constant 1.000000e+00 : f32
    %396 = vector.broadcast %cst_82 : f32 to vector<8x32xf32>
    %397 = arith.addf %396, %395 : vector<8x32xf32>
    %398 = arith.divf %396, %397 : vector<8x32xf32>
    %399 = vector.extract_strided_slice %392 {offsets = [0, 32], sizes = [8, 32], strides = [1, 1]} : vector<8x128xf32> to vector<8x32xf32>
    %400 = arith.negf %399 : vector<8x32xf32>
    %401 = math.exp %400 : vector<8x32xf32>
    %cst_83 = arith.constant 1.000000e+00 : f32
    %402 = vector.broadcast %cst_83 : f32 to vector<8x32xf32>
    %403 = arith.addf %402, %401 : vector<8x32xf32>
    %404 = arith.divf %402, %403 : vector<8x32xf32>
    %405 = vector.extract_strided_slice %392 {offsets = [0, 64], sizes = [8, 32], strides = [1, 1]} : vector<8x128xf32> to vector<8x32xf32>
    %406 = math.tanh %405 : vector<8x32xf32>
    %407 = vector.extract_strided_slice %392 {offsets = [0, 96], sizes = [8, 32], strides = [1, 1]} : vector<8x128xf32> to vector<8x32xf32>
    %408 = arith.negf %407 : vector<8x32xf32>
    %409 = math.exp %408 : vector<8x32xf32>
    %cst_84 = arith.constant 1.000000e+00 : f32
    %410 = vector.broadcast %cst_84 : f32 to vector<8x32xf32>
    %411 = arith.addf %410, %409 : vector<8x32xf32>
    %412 = arith.divf %410, %411 : vector<8x32xf32>
    %413 = arith.mulf %404, %387 : vector<8x32xf32>
    %414 = arith.mulf %398, %406 : vector<8x32xf32>
    %415 = arith.addf %413, %414 : vector<8x32xf32>
    %416 = math.tanh %415 : vector<8x32xf32>
    %417 = arith.mulf %412, %416 : vector<8x32xf32>
    %418 = vector.extract_strided_slice %247 {offsets = [48, 0], sizes = [8, 128], strides = [1, 1]} : vector<64x128xf32> to vector<8x128xf32>
    %cst_85 = arith.constant dense<0.000000e+00> : vector<8x128xf32>
    %419 = tpu.matmul %417, %243, %cst_85 {dimension_numbers = #tpu.dot_dimension_numbers<[1], [0], [0], [1], [0, 0, 1, 1], [], []>} : vector<8x32xf32>, vector<32x128xf32>, vector<8x128xf32> -> vector<8x128xf32>
    %420 = arith.addf %418, %419 : vector<8x128xf32>
    %421 = vector.extract_strided_slice %420 {offsets = [0, 0], sizes = [8, 32], strides = [1, 1]} : vector<8x128xf32> to vector<8x32xf32>
    %422 = arith.negf %421 : vector<8x32xf32>
    %423 = math.exp %422 : vector<8x32xf32>
    %cst_86 = arith.constant 1.000000e+00 : f32
    %424 = vector.broadcast %cst_86 : f32 to vector<8x32xf32>
    %425 = arith.addf %424, %423 : vector<8x32xf32>
    %426 = arith.divf %424, %425 : vector<8x32xf32>
    %427 = vector.extract_strided_slice %420 {offsets = [0, 32], sizes = [8, 32], strides = [1, 1]} : vector<8x128xf32> to vector<8x32xf32>
    %428 = arith.negf %427 : vector<8x32xf32>
    %429 = math.exp %428 : vector<8x32xf32>
    %cst_87 = arith.constant 1.000000e+00 : f32
    %430 = vector.broadcast %cst_87 : f32 to vector<8x32xf32>
    %431 = arith.addf %430, %429 : vector<8x32xf32>
    %432 = arith.divf %430, %431 : vector<8x32xf32>
    %433 = vector.extract_strided_slice %420 {offsets = [0, 64], sizes = [8, 32], strides = [1, 1]} : vector<8x128xf32> to vector<8x32xf32>
    %434 = math.tanh %433 : vector<8x32xf32>
    %435 = vector.extract_strided_slice %420 {offsets = [0, 96], sizes = [8, 32], strides = [1, 1]} : vector<8x128xf32> to vector<8x32xf32>
    %436 = arith.negf %435 : vector<8x32xf32>
    %437 = math.exp %436 : vector<8x32xf32>
    %cst_88 = arith.constant 1.000000e+00 : f32
    %438 = vector.broadcast %cst_88 : f32 to vector<8x32xf32>
    %439 = arith.addf %438, %437 : vector<8x32xf32>
    %440 = arith.divf %438, %439 : vector<8x32xf32>
    %441 = arith.mulf %432, %415 : vector<8x32xf32>
    %442 = arith.mulf %426, %434 : vector<8x32xf32>
    %443 = arith.addf %441, %442 : vector<8x32xf32>
    %444 = math.tanh %443 : vector<8x32xf32>
    %445 = arith.mulf %440, %444 : vector<8x32xf32>
    %446 = vector.extract_strided_slice %247 {offsets = [56, 0], sizes = [8, 128], strides = [1, 1]} : vector<64x128xf32> to vector<8x128xf32>
    %cst_89 = arith.constant dense<0.000000e+00> : vector<8x128xf32>
    %447 = tpu.matmul %445, %243, %cst_89 {dimension_numbers = #tpu.dot_dimension_numbers<[1], [0], [0], [1], [0, 0, 1, 1], [], []>} : vector<8x32xf32>, vector<32x128xf32>, vector<8x128xf32> -> vector<8x128xf32>
    %448 = arith.addf %446, %447 : vector<8x128xf32>
    %449 = vector.extract_strided_slice %448 {offsets = [0, 0], sizes = [8, 32], strides = [1, 1]} : vector<8x128xf32> to vector<8x32xf32>
    %450 = arith.negf %449 : vector<8x32xf32>
    %451 = math.exp %450 : vector<8x32xf32>
    %cst_90 = arith.constant 1.000000e+00 : f32
    %452 = vector.broadcast %cst_90 : f32 to vector<8x32xf32>
    %453 = arith.addf %452, %451 : vector<8x32xf32>
    %454 = arith.divf %452, %453 : vector<8x32xf32>
    %455 = vector.extract_strided_slice %448 {offsets = [0, 32], sizes = [8, 32], strides = [1, 1]} : vector<8x128xf32> to vector<8x32xf32>
    %456 = arith.negf %455 : vector<8x32xf32>
    %457 = math.exp %456 : vector<8x32xf32>
    %cst_91 = arith.constant 1.000000e+00 : f32
    %458 = vector.broadcast %cst_91 : f32 to vector<8x32xf32>
    %459 = arith.addf %458, %457 : vector<8x32xf32>
    %460 = arith.divf %458, %459 : vector<8x32xf32>
    %461 = vector.extract_strided_slice %448 {offsets = [0, 64], sizes = [8, 32], strides = [1, 1]} : vector<8x128xf32> to vector<8x32xf32>
    %462 = math.tanh %461 : vector<8x32xf32>
    %463 = vector.extract_strided_slice %448 {offsets = [0, 96], sizes = [8, 32], strides = [1, 1]} : vector<8x128xf32> to vector<8x32xf32>
    %464 = arith.negf %463 : vector<8x32xf32>
    %465 = math.exp %464 : vector<8x32xf32>
    %cst_92 = arith.constant 1.000000e+00 : f32
    %466 = vector.broadcast %cst_92 : f32 to vector<8x32xf32>
    %467 = arith.addf %466, %465 : vector<8x32xf32>
    %468 = arith.divf %466, %467 : vector<8x32xf32>
    %469 = arith.mulf %460, %443 : vector<8x32xf32>
    %470 = arith.mulf %454, %462 : vector<8x32xf32>
    %471 = arith.addf %469, %470 : vector<8x32xf32>
    %472 = math.tanh %471 : vector<8x32xf32>
    %473 = arith.mulf %468, %472 : vector<8x32xf32>
    %c0_93 = arith.constant 0 : index
    %c0_94 = arith.constant 0 : index
    %474 = vector.load %arg7[%c0_93, %c0_94] : memref<32x8xf32, #tpu.memory_space<vmem>>, vector<32x8xf32>
    %cst_95 = arith.constant dense<0.000000e+00> : vector<8x8xf32>
    %475 = tpu.matmul %473, %474, %cst_95 {dimension_numbers = #tpu.dot_dimension_numbers<[1], [0], [0], [1], [0, 0, 1, 1], [], []>} : vector<8x32xf32>, vector<32x8xf32>, vector<8x8xf32> -> vector<8x8xf32>
    %c0_96 = arith.constant 0 : index
    %c0_97 = arith.constant 0 : index
    %476 = vector.load %arg8[%c0_96, %c0_97] : memref<1x8xf32, #tpu.memory_space<vmem>>, vector<1x8xf32>
    %477 = vector.broadcast %476 : vector<1x8xf32> to vector<8x8xf32>
    %478 = arith.addf %475, %477 : vector<8x8xf32>
    %c0_98 = arith.constant 0 : index
    %c0_99 = arith.constant 0 : index
    %479 = vector.load %arg9[%c0_98, %c0_99] : memref<8x8xf32, #tpu.memory_space<vmem>>, vector<8x8xf32>
    tpu.vector_store %arg9[%c0_98, %c0_99], %478 {strides = array<i32>} : memref<8x8xf32, #tpu.memory_space<vmem>>, vector<8x8xf32>,
    return
  }
}

</mosaic_0001>

<llo_original>
// kernel: lstm_forward.1
$region0: #{lstm_forward.1}
  #allocation0 [shape = 'u32[]', space=smem, size = 0x4, offset = 0x4, fixed_abs, tag = 'smem constant byte address 0x4 - core index']
  #allocation1 [shape = 'u32[72,128]{1,0:T(1,128)}', space=vmem, size = 0x9000, scoped, tag = 'internal scratch']
  #allocation2 [shape = 'f32[64,32]{1,0:T(8,128)}', space=vmem, size = 0x8000, scoped, tag = 'scratch operand']
  %s0 = inlined_call_operand.vmem [shape: f32[64,16], index: 0, kind: input, shape index: {}]
  %s1 = inlined_call_operand.vmem [shape: f32[16,128], index: 1, kind: input, shape index: {}]
  %s2 = inlined_call_operand.vmem [shape: f32[32,128], index: 2, kind: input, shape index: {}]
  %s3 = inlined_call_operand.vmem [shape: f32[1,128], index: 3, kind: input, shape index: {}]
  %s4 = inlined_call_operand.vmem [shape: f32[32,128], index: 4, kind: input, shape index: {}]
  %s5 = inlined_call_operand.vmem [shape: f32[32,128], index: 5, kind: input, shape index: {}]
  %s6 = inlined_call_operand.vmem [shape: f32[1,128], index: 6, kind: input, shape index: {}]
  %s7 = inlined_call_operand.vmem [shape: f32[32,8], index: 7, kind: input, shape index: {}]
  %s8 = inlined_call_operand.vmem [shape: f32[1,8], index: 8, kind: input, shape index: {}]
  %s9 = inlined_call_operand.vmem [shape: f32[8,8], index: 9, kind: output, shape index: {}]
  %s10 = sld [smem:[#allocation0]]
  $region46: #{lstm_forward.1} parent=0
    _
  %s12 = ssub.s32 1, %s10
  %s13 = scalar_select 0, %s12, %s10
  // Predicated region
  $region2: #{lstm_forward.1} parent=0 // pred_check
    _
  $region3: #{lstm_forward.1} parent=0 // pred_check_branch
    %15 = sbr.rel (0) target = $region5
  $region4: #{lstm_forward.1} parent=0 // pred_region
    _
  $region5: #{lstm_forward.1} parent=0 // pred_fallthru
    _
  // Predicated region
  $region6: #{lstm_forward.1} parent=0 // pred_check
    _
  $region7: #{lstm_forward.1} parent=0 // pred_check_branch
    %17 = sbr.rel (0) target = $region9
  $region8: #{lstm_forward.1} parent=0 // pred_region
    _
  $region9: #{lstm_forward.1} parent=0 // pred_fallthru
    _
  // Predicated region
  $region10: #{lstm_forward.1} parent=0 // pred_check
    _
  $region11: #{lstm_forward.1} parent=0 // pred_check_branch
    %19 = sbr.rel (0) target = $region13
  $region12: #{lstm_forward.1} parent=0 // pred_region
    _
  $region13: #{lstm_forward.1} parent=0 // pred_fallthru
    _
  // Predicated region
  $region14: #{lstm_forward.1} parent=0 // pred_check
    _
  $region15: #{lstm_forward.1} parent=0 // pred_check_branch
    %21 = sbr.rel (0) target = $region17
  $region16: #{lstm_forward.1} parent=0 // pred_region
    _
  $region17: #{lstm_forward.1} parent=0 // pred_fallthru
    _
  // Predicated region
  $region18: #{lstm_forward.1} parent=0 // pred_check
    _
  $region19: #{lstm_forward.1} parent=0 // pred_check_branch
    %23 = sbr.rel (0) target = $region21
  $region20: #{lstm_forward.1} parent=0 // pred_region
    _
  $region21: #{lstm_forward.1} parent=0 // pred_fallthru
    _
  // Predicated region
  $region22: #{lstm_forward.1} parent=0 // pred_check
    _
  $region23: #{lstm_forward.1} parent=0 // pred_check_branch
    %25 = sbr.rel (0) target = $region25
  $region24: #{lstm_forward.1} parent=0 // pred_region
    _
  $region25: #{lstm_forward.1} parent=0 // pred_fallthru
    _
  // Predicated region
  $region26: #{lstm_forward.1} parent=0 // pred_check
    _
  $region27: #{lstm_forward.1} parent=0 // pred_check_branch
    %27 = sbr.rel (0) target = $region29
  $region28: #{lstm_forward.1} parent=0 // pred_region
    _
  $region29: #{lstm_forward.1} parent=0 // pred_fallthru
    _
  // Predicated region
  $region30: #{lstm_forward.1} parent=0 // pred_check
    _
  $region31: #{lstm_forward.1} parent=0 // pred_check_branch
    %29 = sbr.rel (0) target = $region33
  $region32: #{lstm_forward.1} parent=0 // pred_region
    _
  $region33: #{lstm_forward.1} parent=0 // pred_fallthru
    _
  // Predicated region
  $region34: #{lstm_forward.1} parent=0 // pred_check
    _
  $region35: #{lstm_forward.1} parent=0 // pred_check_branch
    %31 = sbr.rel (0) target = $region37
  $region36: #{lstm_forward.1} parent=0 // pred_region
    _
  $region37: #{lstm_forward.1} parent=0 // pred_fallthru
    _
  %v32 = vld [vmem:[%s0] sm:$0xff]
  %v33 = vld [vmem:[%s0 + $0x8] sm:$0xff]
  %v34 = vld [vmem:[%s0 + $0x10] sm:$0xff]
  %v35 = vld [vmem:[%s0 + $0x18] sm:$0xff]
  %v36 = vld [vmem:[%s0 + $0x20] sm:$0xff]
  %v37 = vld [vmem:[%s0 + $0x28] sm:$0xff]
  %v38 = vld [vmem:[%s0 + $0x30] sm:$0xff]
  %v39 = vld [vmem:[%s0 + $0x38] sm:$0xff]
  %v40 = vld [vmem:[%s1] sm:$0xff]
  %v41 = vld [vmem:[%s1 + $0x8] sm:$0xff]
  %v42 = vld [vmem:[%s2] sm:$0xff]
  %v43 = vld [vmem:[%s2 + $0x8] sm:$0xff]
  %v44 = vld [vmem:[%s2 + $0x10] sm:$0xff]
  %v45 = vld [vmem:[%s2 + $0x18] sm:$0xff]
  %v46 = vld [vmem:[%s3] sm:$0x1]
  %v48 = vperm.slane %v46, 0
  %vm50 = vcmask 130048
  %v52 = vsel %vm50, %v32, 0
  %v55 = vsel %vm50, %v33, 0
  %v58 = vsel %vm50, %v34, 0
  %v61 = vsel %vm50, %v35, 0
  %v64 = vsel %vm50, %v36, 0
  %v67 = vsel %vm50, %v37, 0
  %v70 = vsel %vm50, %v38, 0
  %v73 = vsel %vm50, %v39, 0
  %75 = vmatpush.msra.mxu0 0.0
  %76 = vmatpush.msra.mxu0 0.0
  %77 = vmatpush.msra.mxu0 0.0
  %78 = vmatpush.msra.mxu0 0.0
  %79 = vmatpush.msra.mxu0 0.0
  %80 = vmatpush.msra.mxu0 0.0
  %81 = vmatpush.msra.mxu0 0.0
  %82 = vmatpush.msra.mxu0 0.0
  %83 = vmatpush.msra.mxu0 0.0
  %84 = vmatpush.msra.mxu0 0.0
  %85 = vmatpush.msra.mxu0 0.0
  %86 = vmatpush.msra.mxu0 0.0
  %87 = vmatpush.msra.mxu0 0.0
  %88 = vmatpush.msra.mxu0 0.0
  %89 = vmatpush.msra.mxu0 %v41
  %90 = vmatpush.msra.mxu0 %v40
  %91 = vmatmul.f32.gmra.mxu0 %v52
  %v92 = vpop.f32.mrf.mxu0
  %v93 = vadd.f32 %v48, %v92
  %94 = vmatmul.f32.gmra.mxu0 %v55
  %v95 = vpop.f32.mrf.mxu0
  %v96 = vadd.f32 %v48, %v95
  %97 = vmatmul.f32.gmra.mxu0 %v58
  %v98 = vpop.f32.mrf.mxu0
  %v99 = vadd.f32 %v48, %v98
  %100 = vmatmul.f32.gmra.mxu0 %v61
  %v101 = vpop.f32.mrf.mxu0
  %v102 = vadd.f32 %v48, %v101
  %103 = vmatmul.f32.gmra.mxu0 %v64
  %v104 = vpop.f32.mrf.mxu0
  %v105 = vadd.f32 %v48, %v104
  %106 = vmatmul.f32.gmra.mxu0 %v67
  %v107 = vpop.f32.mrf.mxu0
  %v108 = vadd.f32 %v48, %v107
  %109 = vmatmul.f32.gmra.mxu0 %v70
  %v110 = vpop.f32.mrf.mxu0
  %v111 = vadd.f32 %v48, %v110
  %112 = vmatmul.f32.gmra.mxu0 %v73
  %v113 = vpop.f32.mrf.mxu0
  %v114 = vadd.f32 %v48, %v113
  %115 = vdwg.mxu0
  %vm116 = vcmask 261120
  %v118 = vsel %vm116, 0.0, 0
  %120 = vmatpush.msra.mxu0 0.0
  %121 = vmatpush.msra.mxu0 0.0
  %122 = vmatpush.msra.mxu0 0.0
  %123 = vmatpush.msra.mxu0 0.0
  %124 = vmatpush.msra.mxu0 0.0
  %125 = vmatpush.msra.mxu0 0.0
  %126 = vmatpush.msra.mxu0 0.0
  %127 = vmatpush.msra.mxu0 0.0
  %128 = vmatpush.msra.mxu0 0.0
  %129 = vmatpush.msra.mxu0 0.0
  %130 = vmatpush.msra.mxu0 0.0
  %131 = vmatpush.msra.mxu0 0.0
  %132 = vmatpush.msra.mxu0 %v45
  %133 = vmatpush.msra.mxu0 %v44
  %134 = vmatpush.msra.mxu0 %v43
  %135 = vmatpush.msra.mxu0 %v42
  %136 = vmatmul.f32.gmra.mxu0 %v118
  %v137 = vpop.f32.mrf.mxu0
  %v138 = vadd.f32 0.0, %v137
  %139 = vdwg.mxu0
  %v140 = vadd.f32 %v93, %v138
  %v141 = vxor.u32 %v140, 2147483648
  %v142 = vmul.f32 %v141, 1.442695
  %v143 = vpow.pop %v142
  %v144 = vadd.f32 %v143, 1.0
  %v145 = vrcp.pop %v144
  %v146 = vmul.f32 %v144, %v145
  %v147 = vsub.f32 1.0, %v146
  %v148 = vmul.f32 %v145, %v147
  %v149 = vadd.f32 %v145, %v148
  %vm150 = vweird.f32 %v144
  %vm151 = vweird.f32 %v145
  %vm152 = vmor %vm150, %vm151
  %v153 = vsel %vm152, %v145, %v149
  %v154 = vand.u32 2147483647, %v144
  %vm155 = vcmp.eq.f32.partialorder %v154, 8.507059e+37
  %v156 = vand.u32 %v144, 2147483648
  %v157 = vor.u32 1.1754944e-38, %v156
  %v158 = vsel %vm155, %v157, %v153
  %v159 = vmul.f32 1.0, %v158
  %v160 = vtanh.pop %v140
  %v161 = vmul.f32 %v159, 0.0
  %163 = vrot.lane.b32.xlu0 %v160, 64
  %v164 = vpop.permute.xlu0 %163
  %v166 = vmul.f32 %v159, %v164
  %168 = vrot.lane.b32.xlu0 %v166, 32
  %v169 = vpop.permute.xlu0 %168
  %v171 = vadd.f32 %v161, %v169
  %v172 = vtanh.pop %v171
  %174 = vrot.lane.b32.xlu0 %v172, 64
  %v175 = vpop.permute.xlu0 %174
  %v177 = vmul.f32 %v159, %v175
  %179 = vrot.lane.b32.xlu0 %v177, 32
  %v180 = vpop.permute.xlu0 %179
  %182 = vst.msk [vmem:[#allocation2] sm:$0xff] %vm116, %v180
  %v183 = vsel %vm116, %v180, 0
  %185 = vmatpush.msra.mxu0 0.0
  %186 = vmatpush.msra.mxu0 0.0
  %187 = vmatpush.msra.mxu0 0.0
  %188 = vmatpush.msra.mxu0 0.0
  %189 = vmatpush.msra.mxu0 0.0
  %190 = vmatpush.msra.mxu0 0.0
  %191 = vmatpush.msra.mxu0 0.0
  %192 = vmatpush.msra.mxu0 0.0
  %193 = vmatpush.msra.mxu0 0.0
  %194 = vmatpush.msra.mxu0 0.0
  %195 = vmatpush.msra.mxu0 0.0
  %196 = vmatpush.msra.mxu0 0.0
  %197 = vmatpush.msra.mxu0 %v45
  %198 = vmatpush.msra.mxu0 %v44
  %199 = vmatpush.msra.mxu0 %v43
  %200 = vmatpush.msra.mxu0 %v42
  %201 = vmatmul.f32.gmra.mxu0 %v183
  %v202 = vpop.f32.mrf.mxu0
  %v203 = vadd.f32 0.0, %v202
  %204 = vdwg.mxu0
  %v205 = vadd.f32 %v96, %v203
  %v206 = vxor.u32 %v205, 2147483648
  %v207 = vmul.f32 %v206, 1.442695
  %v208 = vpow.pop %v207
  %v209 = vadd.f32 %v208, 1.0
  %v210 = vrcp.pop %v209
  %v211 = vmul.f32 %v209, %v210
  %v212 = vsub.f32 1.0, %v211
  %v213 = vmul.f32 %v210, %v212
  %v214 = vadd.f32 %v210, %v213
  %vm215 = vweird.f32 %v209
  %vm216 = vweird.f32 %v210
  %vm217 = vmor %vm215, %vm216
  %v218 = vsel %vm217, %v210, %v214
  %v219 = vand.u32 2147483647, %v209
  %vm220 = vcmp.eq.f32.partialorder %v219, 8.507059e+37
  %v221 = vand.u32 %v209, 2147483648
  %v222 = vor.u32 1.1754944e-38, %v221
  %v223 = vsel %vm220, %v222, %v218
  %v224 = vmul.f32 1.0, %v223
  %v225 = vtanh.pop %v205
  %v226 = vmul.f32 %v224, %v171
  %228 = vrot.lane.b32.xlu0 %v225, 64
  %v229 = vpop.permute.xlu0 %228
  %v231 = vmul.f32 %v224, %v229
  %233 = vrot.lane.b32.xlu0 %v231, 32
  %v234 = vpop.permute.xlu0 %233
  %v236 = vadd.f32 %v226, %v234
  %v237 = vtanh.pop %v236
  %239 = vrot.lane.b32.xlu0 %v237, 64
  %v240 = vpop.permute.xlu0 %239
  %v242 = vmul.f32 %v224, %v240
  %244 = vrot.lane.b32.xlu0 %v242, 32
  %v245 = vpop.permute.xlu0 %244
  %247 = vst.msk [vmem:[#allocation2 + $0x8] sm:$0xff] %vm116, %v245
  %v248 = vsel %vm116, %v245, 0
  %250 = vmatpush.msra.mxu0 0.0
  %251 = vmatpush.msra.mxu0 0.0
  %252 = vmatpush.msra.mxu0 0.0
  %253 = vmatpush.msra.mxu0 0.0
  %254 = vmatpush.msra.mxu0 0.0
  %255 = vmatpush.msra.mxu0 0.0
  %256 = vmatpush.msra.mxu0 0.0
  %257 = vmatpush.msra.mxu0 0.0
  %258 = vmatpush.msra.mxu0 0.0
  %259 = vmatpush.msra.mxu0 0.0
  %260 = vmatpush.msra.mxu0 0.0
  %261 = vmatpush.msra.mxu0 0.0
  %262 = vmatpush.msra.mxu0 %v45
  %263 = vmatpush.msra.mxu0 %v44
  %264 = vmatpush.msra.mxu0 %v43
  %265 = vmatpush.msra.mxu0 %v42
  %266 = vmatmul.f32.gmra.mxu0 %v248
  %v267 = vpop.f32.mrf.mxu0
  %v268 = vadd.f32 0.0, %v267
  %269 = vdwg.mxu0
  %v270 = vadd.f32 %v99, %v268
  %v271 = vxor.u32 %v270, 2147483648
  %v272 = vmul.f32 %v271, 1.442695
  %v273 = vpow.pop %v272
  %v274 = vadd.f32 %v273, 1.0
  %v275 = vrcp.pop %v274
  %v276 = vmul.f32 %v274, %v275
  %v277 = vsub.f32 1.0, %v276
  %v278 = vmul.f32 %v275, %v277
  %v279 = vadd.f32 %v275, %v278
  %vm280 = vweird.f32 %v274
  %vm281 = vweird.f32 %v275
  %vm282 = vmor %vm280, %vm281
  %v283 = vsel %vm282, %v275, %v279
  %v284 = vand.u32 2147483647, %v274
  %vm285 = vcmp.eq.f32.partialorder %v284, 8.507059e+37
  %v286 = vand.u32 %v274, 2147483648
  %v287 = vor.u32 1.1754944e-38, %v286
  %v288 = vsel %vm285, %v287, %v283
  %v289 = vmul.f32 1.0, %v288
  %v290 = vtanh.pop %v270
  %v291 = vmul.f32 %v289, %v236
  %293 = vrot.lane.b32.xlu0 %v290, 64
  %v294 = vpop.permute.xlu0 %293
  %v296 = vmul.f32 %v289, %v294
  %298 = vrot.lane.b32.xlu0 %v296, 32
  %v299 = vpop.permute.xlu0 %298
  %v301 = vadd.f32 %v291, %v299
  %v302 = vtanh.pop %v301
  %304 = vrot.lane.b32.xlu0 %v302, 64
  %v305 = vpop.permute.xlu0 %304
  %v307 = vmul.f32 %v289, %v305
  %309 = vrot.lane.b32.xlu0 %v307, 32
  %v310 = vpop.permute.xlu0 %309
  %312 = vst.msk [vmem:[#allocation2 + $0x10] sm:$0xff] %vm116, %v310
  %v313 = vsel %vm116, %v310, 0
  %315 = vmatpush.msra.mxu0 0.0
  %316 = vmatpush.msra.mxu0 0.0
  %317 = vmatpush.msra.mxu0 0.0
  %318 = vmatpush.msra.mxu0 0.0
  %319 = vmatpush.msra.mxu0 0.0
  %320 = vmatpush.msra.mxu0 0.0
  %321 = vmatpush.msra.mxu0 0.0
  %322 = vmatpush.msra.mxu0 0.0
  %323 = vmatpush.msra.mxu0 0.0
  %324 = vmatpush.msra.mxu0 0.0
  %325 = vmatpush.msra.mxu0 0.0
  %326 = vmatpush.msra.mxu0 0.0
  %327 = vmatpush.msra.mxu0 %v45
  %328 = vmatpush.msra.mxu0 %v44
  %329 = vmatpush.msra.mxu0 %v43
  %330 = vmatpush.msra.mxu0 %v42
  %331 = vmatmul.f32.gmra.mxu0 %v313
  %v332 = vpop.f32.mrf.mxu0
  %v333 = vadd.f32 0.0, %v332
  %334 = vdwg.mxu0
  %v335 = vadd.f32 %v102, %v333
  %v336 = vxor.u32 %v335, 2147483648
  %v337 = vmul.f32 %v336, 1.442695
  %v338 = vpow.pop %v337
  %v339 = vadd.f32 %v338, 1.0
  %v340 = vrcp.pop %v339
  %v341 = vmul.f32 %v339, %v340
  %v342 = vsub.f32 1.0, %v341
  %v343 = vmul.f32 %v340, %v342
  %v344 = vadd.f32 %v340, %v343
  %vm345 = vweird.f32 %v339
  %vm346 = vweird.f32 %v340
  %vm347 = vmor %vm345, %vm346
  %v348 = vsel %vm347, %v340, %v344
  %v349 = vand.u32 2147483647, %v339
  %vm350 = vcmp.eq.f32.partialorder %v349, 8.507059e+37
  %v351 = vand.u32 %v339, 2147483648
  %v352 = vor.u32 1.1754944e-38, %v351
  %v353 = vsel %vm350, %v352, %v348
  %v354 = vmul.f32 1.0, %v353
  %v355 = vtanh.pop %v335
  %v356 = vmul.f32 %v354, %v301
  %358 = vrot.lane.b32.xlu0 %v355, 64
  %v359 = vpop.permute.xlu0 %358
  %v361 = vmul.f32 %v354, %v359
  %363 = vrot.lane.b32.xlu0 %v361, 32
  %v364 = vpop.permute.xlu0 %363
  %v366 = vadd.f32 %v356, %v364
  %v367 = vtanh.pop %v366
  %369 = vrot.lane.b32.xlu0 %v367, 64
  %v370 = vpop.permute.xlu0 %369
  %v372 = vmul.f32 %v354, %v370
  %374 = vrot.lane.b32.xlu0 %v372, 32
  %v375 = vpop.permute.xlu0 %374
  %377 = vst.msk [vmem:[#allocation2 + $0x18] sm:$0xff] %vm116, %v375
  %v378 = vsel %vm116, %v375, 0
  %380 = vmatpush.msra.mxu0 0.0
  %381 = vmatpush.msra.mxu0 0.0
  %382 = vmatpush.msra.mxu0 0.0
  %383 = vmatpush.msra.mxu0 0.0
  %384 = vmatpush.msra.mxu0 0.0
  %385 = vmatpush.msra.mxu0 0.0
  %386 = vmatpush.msra.mxu0 0.0
  %387 = vmatpush.msra.mxu0 0.0
  %388 = vmatpush.msra.mxu0 0.0
  %389 = vmatpush.msra.mxu0 0.0
  %390 = vmatpush.msra.mxu0 0.0
  %391 = vmatpush.msra.mxu0 0.0
  %392 = vmatpush.msra.mxu0 %v45
  %393 = vmatpush.msra.mxu0 %v44
  %394 = vmatpush.msra.mxu0 %v43
  %395 = vmatpush.msra.mxu0 %v42
  %396 = vmatmul.f32.gmra.mxu0 %v378
  %v397 = vpop.f32.mrf.mxu0
  %v398 = vadd.f32 0.0, %v397
  %399 = vdwg.mxu0
  %v400 = vadd.f32 %v105, %v398
  %v401 = vxor.u32 %v400, 2147483648
  %v402 = vmul.f32 %v401, 1.442695
  %v403 = vpow.pop %v402
  %v404 = vadd.f32 %v403, 1.0
  %v405 = vrcp.pop %v404
  %v406 = vmul.f32 %v404, %v405
  %v407 = vsub.f32 1.0, %v406
  %v408 = vmul.f32 %v405, %v407
  %v409 = vadd.f32 %v405, %v408
  %vm410 = vweird.f32 %v404
  %vm411 = vweird.f32 %v405
  %vm412 = vmor %vm410, %vm411
  %v413 = vsel %vm412, %v405, %v409
  %v414 = vand.u32 2147483647, %v404
  %vm415 = vcmp.eq.f32.partialorder %v414, 8.507059e+37
  %v416 = vand.u32 %v404, 2147483648
  %v417 = vor.u32 1.1754944e-38, %v416
  %v418 = vsel %vm415, %v417, %v413
  %v419 = vmul.f32 1.0, %v418
  %v420 = vtanh.pop %v400
  %v421 = vmul.f32 %v419, %v366
  %423 = vrot.lane.b32.xlu0 %v420, 64
  %v424 = vpop.permute.xlu0 %423
  %v426 = vmul.f32 %v419, %v424
  %428 = vrot.lane.b32.xlu0 %v426, 32
  %v429 = vpop.permute.xlu0 %428
  %v431 = vadd.f32 %v421, %v429
  %v432 = vtanh.pop %v431
  %434 = vrot.lane.b32.xlu0 %v432, 64
  %v435 = vpop.permute.xlu0 %434
  %v437 = vmul.f32 %v419, %v435
  %439 = vrot.lane.b32.xlu0 %v437, 32
  %v440 = vpop.permute.xlu0 %439
  %442 = vst.msk [vmem:[#allocation2 + $0x20] sm:$0xff] %vm116, %v440
  %v443 = vsel %vm116, %v440, 0
  %445 = vmatpush.msra.mxu0 0.0
  %446 = vmatpush.msra.mxu0 0.0
  %447 = vmatpush.msra.mxu0 0.0
  %448 = vmatpush.msra.mxu0 0.0
  %449 = vmatpush.msra.mxu0 0.0
  %450 = vmatpush.msra.mxu0 0.0
  %451 = vmatpush.msra.mxu0 0.0
  %452 = vmatpush.msra.mxu0 0.0
  %453 = vmatpush.msra.mxu0 0.0
  %454 = vmatpush.msra.mxu0 0.0
  %455 = vmatpush.msra.mxu0 0.0
  %456 = vmatpush.msra.mxu0 0.0
  %457 = vmatpush.msra.mxu0 %v45
  %458 = vmatpush.msra.mxu0 %v44
  %459 = vmatpush.msra.mxu0 %v43
  %460 = vmatpush.msra.mxu0 %v42
  %461 = vmatmul.f32.gmra.mxu0 %v443
  %v462 = vpop.f32.mrf.mxu0
  %v463 = vadd.f32 0.0, %v462
  %464 = vdwg.mxu0
  %v465 = vadd.f32 %v108, %v463
  %v466 = vxor.u32 %v465, 2147483648
  %v467 = vmul.f32 %v466, 1.442695
  %v468 = vpow.pop %v467
  %v469 = vadd.f32 %v468, 1.0
  %v470 = vrcp.pop %v469
  %v471 = vmul.f32 %v469, %v470
  %v472 = vsub.f32 1.0, %v471
  %v473 = vmul.f32 %v470, %v472
  %v474 = vadd.f32 %v470, %v473
  %vm475 = vweird.f32 %v469
  %vm476 = vweird.f32 %v470
  %vm477 = vmor %vm475, %vm476
  %v478 = vsel %vm477, %v470, %v474
  %v479 = vand.u32 2147483647, %v469
  %vm480 = vcmp.eq.f32.partialorder %v479, 8.507059e+37
  %v481 = vand.u32 %v469, 2147483648
  %v482 = vor.u32 1.1754944e-38, %v481
  %v483 = vsel %vm480, %v482, %v478
  %v484 = vmul.f32 1.0, %v483
  %v485 = vtanh.pop %v465
  %v486 = vmul.f32 %v484, %v431
  %488 = vrot.lane.b32.xlu0 %v485, 64
  %v489 = vpop.permute.xlu0 %488
  %v491 = vmul.f32 %v484, %v489
  %493 = vrot.lane.b32.xlu0 %v491, 32
  %v494 = vpop.permute.xlu0 %493
  %v496 = vadd.f32 %v486, %v494
  %v497 = vtanh.pop %v496
  %499 = vrot.lane.b32.xlu0 %v497, 64
  %v500 = vpop.permute.xlu0 %499
  %v502 = vmul.f32 %v484, %v500
  %504 = vrot.lane.b32.xlu0 %v502, 32
  %v505 = vpop.permute.xlu0 %504
  %507 = vst.msk [vmem:[#allocation2 + $0x28] sm:$0xff] %vm116, %v505
  %v508 = vsel %vm116, %v505, 0
  %510 = vmatpush.msra.mxu0 0.0
  %511 = vmatpush.msra.mxu0 0.0
  %512 = vmatpush.msra.mxu0 0.0
  %513 = vmatpush.msra.mxu0 0.0
  %514 = vmatpush.msra.mxu0 0.0
  %515 = vmatpush.msra.mxu0 0.0
  %516 = vmatpush.msra.mxu0 0.0
  %517 = vmatpush.msra.mxu0 0.0
  %518 = vmatpush.msra.mxu0 0.0
  %519 = vmatpush.msra.mxu0 0.0
  %520 = vmatpush.msra.mxu0 0.0
  %521 = vmatpush.msra.mxu0 0.0
  %522 = vmatpush.msra.mxu0 %v45
  %523 = vmatpush.msra.mxu0 %v44
  %524 = vmatpush.msra.mxu0 %v43
  %525 = vmatpush.msra.mxu0 %v42
  %526 = vmatmul.f32.gmra.mxu0 %v508
  %v527 = vpop.f32.mrf.mxu0
  %v528 = vadd.f32 0.0, %v527
  %529 = vdwg.mxu0
  %v530 = vadd.f32 %v111, %v528
  %v531 = vxor.u32 %v530, 2147483648
  %v532 = vmul.f32 %v531, 1.442695
  %v533 = vpow.pop %v532
  %v534 = vadd.f32 %v533, 1.0
  %v535 = vrcp.pop %v534
  %v536 = vmul.f32 %v534, %v535
  %v537 = vsub.f32 1.0, %v536
  %v538 = vmul.f32 %v535, %v537
  %v539 = vadd.f32 %v535, %v538
  %vm540 = vweird.f32 %v534
  %vm541 = vweird.f32 %v535
  %vm542 = vmor %vm540, %vm541
  %v543 = vsel %vm542, %v535, %v539
  %v544 = vand.u32 2147483647, %v534
  %vm545 = vcmp.eq.f32.partialorder %v544, 8.507059e+37
  %v546 = vand.u32 %v534, 2147483648
  %v547 = vor.u32 1.1754944e-38, %v546
  %v548 = vsel %vm545, %v547, %v543
  %v549 = vmul.f32 1.0, %v548
  %v550 = vtanh.pop %v530
  %v551 = vmul.f32 %v549, %v496
  %553 = vrot.lane.b32.xlu0 %v550, 64
  %v554 = vpop.permute.xlu0 %553
  %v556 = vmul.f32 %v549, %v554
  %558 = vrot.lane.b32.xlu0 %v556, 32
  %v559 = vpop.permute.xlu0 %558
  %v561 = vadd.f32 %v551, %v559
  %v562 = vtanh.pop %v561
  %564 = vrot.lane.b32.xlu0 %v562, 64
  %v565 = vpop.permute.xlu0 %564
  %v567 = vmul.f32 %v549, %v565
  %569 = vrot.lane.b32.xlu0 %v567, 32
  %v570 = vpop.permute.xlu0 %569
  %572 = vst.msk [vmem:[#allocation2 + $0x30] sm:$0xff] %vm116, %v570
  %v573 = vsel %vm116, %v570, 0
  %575 = vmatpush.msra.mxu0 0.0
  %576 = vmatpush.msra.mxu0 0.0
  %577 = vmatpush.msra.mxu0 0.0
  %578 = vmatpush.msra.mxu0 0.0
  %579 = vmatpush.msra.mxu0 0.0
  %580 = vmatpush.msra.mxu0 0.0
  %581 = vmatpush.msra.mxu0 0.0
  %582 = vmatpush.msra.mxu0 0.0
  %583 = vmatpush.msra.mxu0 0.0
  %584 = vmatpush.msra.mxu0 0.0
  %585 = vmatpush.msra.mxu0 0.0
  %586 = vmatpush.msra.mxu0 0.0
  %587 = vmatpush.msra.mxu0 %v45
  %588 = vmatpush.msra.mxu0 %v44
  %589 = vmatpush.msra.mxu0 %v43
  %590 = vmatpush.msra.mxu0 %v42
  %591 = vmatmul.f32.gmra.mxu0 %v573
  %v592 = vpop.f32.mrf.mxu0
  %v593 = vadd.f32 0.0, %v592
  %594 = vdwg.mxu0
  %v595 = vadd.f32 %v114, %v593
  %v596 = vxor.u32 %v595, 2147483648
  %v597 = vmul.f32 %v596, 1.442695
  %v598 = vpow.pop %v597
  %v599 = vadd.f32 %v598, 1.0
  %v600 = vrcp.pop %v599
  %v601 = vmul.f32 %v599, %v600
  %v602 = vsub.f32 1.0, %v601
  %v603 = vmul.f32 %v600, %v602
  %v604 = vadd.f32 %v600, %v603
  %vm605 = vweird.f32 %v599
  %vm606 = vweird.f32 %v600
  %vm607 = vmor %vm605, %vm606
  %v608 = vsel %vm607, %v600, %v604
  %v609 = vand.u32 2147483647, %v599
  %vm610 = vcmp.eq.f32.partialorder %v609, 8.507059e+37
  %v611 = vand.u32 %v599, 2147483648
  %v612 = vor.u32 1.1754944e-38, %v611
  %v613 = vsel %vm610, %v612, %v608
  %v614 = vmul.f32 1.0, %v613
  %v615 = vtanh.pop %v595
  %v616 = vmul.f32 %v614, %v561
  %618 = vrot.lane.b32.xlu0 %v615, 64
  %v619 = vpop.permute.xlu0 %618
  %v621 = vmul.f32 %v614, %v619
  %623 = vrot.lane.b32.xlu0 %v621, 32
  %v624 = vpop.permute.xlu0 %623
  %v626 = vadd.f32 %v616, %v624
  %v627 = vtanh.pop %v626
  %629 = vrot.lane.b32.xlu0 %v627, 64
  %v630 = vpop.permute.xlu0 %629
  %v632 = vmul.f32 %v614, %v630
  %634 = vrot.lane.b32.xlu0 %v632, 32
  %v635 = vpop.permute.xlu0 %634
  %637 = vst.msk [vmem:[#allocation2 + $0x38] sm:$0xff] %vm116, %v635
  %v638 = vld [vmem:[#allocation2] sm:$0xff]
  %v639 = vld [vmem:[#allocation2 + $0x8] sm:$0xff]
  %v640 = vld [vmem:[#allocation2 + $0x10] sm:$0xff]
  %v641 = vld [vmem:[#allocation2 + $0x18] sm:$0xff]
  %v642 = vld [vmem:[#allocation2 + $0x20] sm:$0xff]
  %v643 = vld [vmem:[#allocation2 + $0x28] sm:$0xff]
  %v644 = vld [vmem:[#allocation2 + $0x30] sm:$0xff]
  %v645 = vld [vmem:[#allocation2 + $0x38] sm:$0xff]
  %v646 = vld [vmem:[%s4] sm:$0xff]
  %v647 = vld [vmem:[%s4 + $0x8] sm:$0xff]
  %v648 = vld [vmem:[%s4 + $0x10] sm:$0xff]
  %v649 = vld [vmem:[%s4 + $0x18] sm:$0xff]
  %v650 = vld [vmem:[%s5] sm:$0xff]
  %v651 = vld [vmem:[%s5 + $0x8] sm:$0xff]
  %v652 = vld [vmem:[%s5 + $0x10] sm:$0xff]
  %v653 = vld [vmem:[%s5 + $0x18] sm:$0xff]
  %v654 = vld [vmem:[%s6] sm:$0x1]
  %v656 = vperm.slane %v654, 0
  %v659 = vsel %vm116, %v638, 0
  %v662 = vsel %vm116, %v639, 0
  %v665 = vsel %vm116, %v640, 0
  %v668 = vsel %vm116, %v641, 0
  %v671 = vsel %vm116, %v642, 0
  %v674 = vsel %vm116, %v643, 0
  %v677 = vsel %vm116, %v644, 0
  %v680 = vsel %vm116, %v645, 0
  %682 = vmatpush.msra.mxu0 0.0
  %683 = vmatpush.msra.mxu0 0.0
  %684 = vmatpush.msra.mxu0 0.0
  %685 = vmatpush.msra.mxu0 0.0
  %686 = vmatpush.msra.mxu0 0.0
  %687 = vmatpush.msra.mxu0 0.0
  %688 = vmatpush.msra.mxu0 0.0
  %689 = vmatpush.msra.mxu0 0.0
  %690 = vmatpush.msra.mxu0 0.0
  %691 = vmatpush.msra.mxu0 0.0
  %692 = vmatpush.msra.mxu0 0.0
  %693 = vmatpush.msra.mxu0 0.0
  %694 = vmatpush.msra.mxu0 %v649
  %695 = vmatpush.msra.mxu0 %v648
  %696 = vmatpush.msra.mxu0 %v647
  %697 = vmatpush.msra.mxu0 %v646
  %698 = vmatmul.f32.gmra.mxu0 %v659
  %v699 = vpop.f32.mrf.mxu0
  %v700 = vadd.f32 %v656, %v699
  %701 = vmatmul.f32.gmra.mxu0 %v662
  %v702 = vpop.f32.mrf.mxu0
  %v703 = vadd.f32 %v656, %v702
  %704 = vmatmul.f32.gmra.mxu0 %v665
  %v705 = vpop.f32.mrf.mxu0
  %v706 = vadd.f32 %v656, %v705
  %707 = vmatmul.f32.gmra.mxu0 %v668
  %v708 = vpop.f32.mrf.mxu0
  %v709 = vadd.f32 %v656, %v708
  %710 = vmatmul.f32.gmra.mxu0 %v671
  %v711 = vpop.f32.mrf.mxu0
  %v712 = vadd.f32 %v656, %v711
  %713 = vmatmul.f32.gmra.mxu0 %v674
  %v714 = vpop.f32.mrf.mxu0
  %v715 = vadd.f32 %v656, %v714
  %716 = vmatmul.f32.gmra.mxu0 %v677
  %v717 = vpop.f32.mrf.mxu0
  %v718 = vadd.f32 %v656, %v717
  %719 = vmatmul.f32.gmra.mxu0 %v680
  %v720 = vpop.f32.mrf.mxu0
  %v721 = vadd.f32 %v656, %v720
  %722 = vdwg.mxu0
  %723 = vmatpush.msra.mxu0 0.0
  %724 = vmatpush.msra.mxu0 0.0
  %725 = vmatpush.msra.mxu0 0.0
  %726 = vmatpush.msra.mxu0 0.0
  %727 = vmatpush.msra.mxu0 0.0
  %728 = vmatpush.msra.mxu0 0.0
  %729 = vmatpush.msra.mxu0 0.0
  %730 = vmatpush.msra.mxu0 0.0
  %731 = vmatpush.msra.mxu0 0.0
  %732 = vmatpush.msra.mxu0 0.0
  %733 = vmatpush.msra.mxu0 0.0
  %734 = vmatpush.msra.mxu0 0.0
  %735 = vmatpush.msra.mxu0 %v653
  %736 = vmatpush.msra.mxu0 %v652
  %737 = vmatpush.msra.mxu0 %v651
  %738 = vmatpush.msra.mxu0 %v650
  %739 = vmatmul.f32.gmra.mxu0 %v118
  %v740 = vpop.f32.mrf.mxu0
  %v741 = vadd.f32 0.0, %v740
  %742 = vdwg.mxu0
  %v743 = vadd.f32 %v700, %v741
  %v744 = vxor.u32 %v743, 2147483648
  %v745 = vmul.f32 %v744, 1.442695
  %v746 = vpow.pop %v745
  %v747 = vadd.f32 %v746, 1.0
  %v748 = vrcp.pop %v747
  %v749 = vmul.f32 %v747, %v748
  %v750 = vsub.f32 1.0, %v749
  %v751 = vmul.f32 %v748, %v750
  %v752 = vadd.f32 %v748, %v751
  %vm753 = vweird.f32 %v747
  %vm754 = vweird.f32 %v748
  %vm755 = vmor %vm753, %vm754
  %v756 = vsel %vm755, %v748, %v752
  %v757 = vand.u32 2147483647, %v747
  %vm758 = vcmp.eq.f32.partialorder %v757, 8.507059e+37
  %v759 = vand.u32 %v747, 2147483648
  %v760 = vor.u32 1.1754944e-38, %v759
  %v761 = vsel %vm758, %v760, %v756
  %v762 = vmul.f32 1.0, %v761
  %v763 = vtanh.pop %v743
  %v764 = vmul.f32 %v762, 0.0
  %766 = vrot.lane.b32.xlu0 %v763, 64
  %v767 = vpop.permute.xlu0 %766
  %v769 = vmul.f32 %v762, %v767
  %771 = vrot.lane.b32.xlu0 %v769, 32
  %v772 = vpop.permute.xlu0 %771
  %v774 = vadd.f32 %v764, %v772
  %v775 = vtanh.pop %v774
  %777 = vrot.lane.b32.xlu0 %v775, 64
  %v778 = vpop.permute.xlu0 %777
  %v780 = vmul.f32 %v762, %v778
  %782 = vrot.lane.b32.xlu0 %v780, 32
  %v783 = vpop.permute.xlu0 %782
  %v784 = vsel %vm116, %v783, 0
  %786 = vmatpush.msra.mxu0 0.0
  %787 = vmatpush.msra.mxu0 0.0
  %788 = vmatpush.msra.mxu0 0.0
  %789 = vmatpush.msra.mxu0 0.0
  %790 = vmatpush.msra.mxu0 0.0
  %791 = vmatpush.msra.mxu0 0.0
  %792 = vmatpush.msra.mxu0 0.0
  %793 = vmatpush.msra.mxu0 0.0
  %794 = vmatpush.msra.mxu0 0.0
  %795 = vmatpush.msra.mxu0 0.0
  %796 = vmatpush.msra.mxu0 0.0
  %797 = vmatpush.msra.mxu0 0.0
  %798 = vmatpush.msra.mxu0 %v653
  %799 = vmatpush.msra.mxu0 %v652
  %800 = vmatpush.msra.mxu0 %v651
  %801 = vmatpush.msra.mxu0 %v650
  %802 = vmatmul.f32.gmra.mxu0 %v784
  %v803 = vpop.f32.mrf.mxu0
  %v804 = vadd.f32 0.0, %v803
  %805 = vdwg.mxu0
  %v806 = vadd.f32 %v703, %v804
  %v807 = vxor.u32 %v806, 2147483648
  %v808 = vmul.f32 %v807, 1.442695
  %v809 = vpow.pop %v808
  %v810 = vadd.f32 %v809, 1.0
  %v811 = vrcp.pop %v810
  %v812 = vmul.f32 %v810, %v811
  %v813 = vsub.f32 1.0, %v812
  %v814 = vmul.f32 %v811, %v813
  %v815 = vadd.f32 %v811, %v814
  %vm816 = vweird.f32 %v810
  %vm817 = vweird.f32 %v811
  %vm818 = vmor %vm816, %vm817
  %v819 = vsel %vm818, %v811, %v815
  %v820 = vand.u32 2147483647, %v810
  %vm821 = vcmp.eq.f32.partialorder %v820, 8.507059e+37
  %v822 = vand.u32 %v810, 2147483648
  %v823 = vor.u32 1.1754944e-38, %v822
  %v824 = vsel %vm821, %v823, %v819
  %v825 = vmul.f32 1.0, %v824
  %v826 = vtanh.pop %v806
  %v827 = vmul.f32 %v825, %v774
  %829 = vrot.lane.b32.xlu0 %v826, 64
  %v830 = vpop.permute.xlu0 %829
  %v832 = vmul.f32 %v825, %v830
  %834 = vrot.lane.b32.xlu0 %v832, 32
  %v835 = vpop.permute.xlu0 %834
  %v837 = vadd.f32 %v827, %v835
  %v838 = vtanh.pop %v837
  %840 = vrot.lane.b32.xlu0 %v838, 64
  %v841 = vpop.permute.xlu0 %840
  %v843 = vmul.f32 %v825, %v841
  %845 = vrot.lane.b32.xlu0 %v843, 32
  %v846 = vpop.permute.xlu0 %845
  %v847 = vsel %vm116, %v846, 0
  %849 = vmatpush.msra.mxu0 0.0
  %850 = vmatpush.msra.mxu0 0.0
  %851 = vmatpush.msra.mxu0 0.0
  %852 = vmatpush.msra.mxu0 0.0
  %853 = vmatpush.msra.mxu0 0.0
  %854 = vmatpush.msra.mxu0 0.0
  %855 = vmatpush.msra.mxu0 0.0
  %856 = vmatpush.msra.mxu0 0.0
  %857 = vmatpush.msra.mxu0 0.0
  %858 = vmatpush.msra.mxu0 0.0
  %859 = vmatpush.msra.mxu0 0.0
  %860 = vmatpush.msra.mxu0 0.0
  %861 = vmatpush.msra.mxu0 %v653
  %862 = vmatpush.msra.mxu0 %v652
  %863 = vmatpush.msra.mxu0 %v651
  %864 = vmatpush.msra.mxu0 %v650
  %865 = vmatmul.f32.gmra.mxu0 %v847
  %v866 = vpop.f32.mrf.mxu0
  %v867 = vadd.f32 0.0, %v866
  %868 = vdwg.mxu0
  %v869 = vadd.f32 %v706, %v867
  %v870 = vxor.u32 %v869, 2147483648
  %v871 = vmul.f32 %v870, 1.442695
  %v872 = vpow.pop %v871
  %v873 = vadd.f32 %v872, 1.0
  %v874 = vrcp.pop %v873
  %v875 = vmul.f32 %v873, %v874
  %v876 = vsub.f32 1.0, %v875
  %v877 = vmul.f32 %v874, %v876
  %v878 = vadd.f32 %v874, %v877
  %vm879 = vweird.f32 %v873
  %vm880 = vweird.f32 %v874
  %vm881 = vmor %vm879, %vm880
  %v882 = vsel %vm881, %v874, %v878
  %v883 = vand.u32 2147483647, %v873
  %vm884 = vcmp.eq.f32.partialorder %v883, 8.507059e+37
  %v885 = vand.u32 %v873, 2147483648
  %v886 = vor.u32 1.1754944e-38, %v885
  %v887 = vsel %vm884, %v886, %v882
  %v888 = vmul.f32 1.0, %v887
  %v889 = vtanh.pop %v869
  %v890 = vmul.f32 %v888, %v837
  %892 = vrot.lane.b32.xlu0 %v889, 64
  %v893 = vpop.permute.xlu0 %892
  %v895 = vmul.f32 %v888, %v893
  %897 = vrot.lane.b32.xlu0 %v895, 32
  %v898 = vpop.permute.xlu0 %897
  %v900 = vadd.f32 %v890, %v898
  %v901 = vtanh.pop %v900
  %903 = vrot.lane.b32.xlu0 %v901, 64
  %v904 = vpop.permute.xlu0 %903
  %v906 = vmul.f32 %v888, %v904
  %908 = vrot.lane.b32.xlu0 %v906, 32
  %v909 = vpop.permute.xlu0 %908
  %v910 = vsel %vm116, %v909, 0
  %912 = vmatpush.msra.mxu0 0.0
  %913 = vmatpush.msra.mxu0 0.0
  %914 = vmatpush.msra.mxu0 0.0
  %915 = vmatpush.msra.mxu0 0.0
  %916 = vmatpush.msra.mxu0 0.0
  %917 = vmatpush.msra.mxu0 0.0
  %918 = vmatpush.msra.mxu0 0.0
  %919 = vmatpush.msra.mxu0 0.0
  %920 = vmatpush.msra.mxu0 0.0
  %921 = vmatpush.msra.mxu0 0.0
  %922 = vmatpush.msra.mxu0 0.0
  %923 = vmatpush.msra.mxu0 0.0
  %924 = vmatpush.msra.mxu0 %v653
  %925 = vmatpush.msra.mxu0 %v652
  %926 = vmatpush.msra.mxu0 %v651
  %927 = vmatpush.msra.mxu0 %v650
  %928 = vmatmul.f32.gmra.mxu0 %v910
  %v929 = vpop.f32.mrf.mxu0
  %v930 = vadd.f32 0.0, %v929
  %931 = vdwg.mxu0
  %v932 = vadd.f32 %v709, %v930
  %v933 = vxor.u32 %v932, 2147483648
  %v934 = vmul.f32 %v933, 1.442695
  %v935 = vpow.pop %v934
  %v936 = vadd.f32 %v935, 1.0
  %v937 = vrcp.pop %v936
  %v938 = vmul.f32 %v936, %v937
  %v939 = vsub.f32 1.0, %v938
  %v940 = vmul.f32 %v937, %v939
  %v941 = vadd.f32 %v937, %v940
  %vm942 = vweird.f32 %v936
  %vm943 = vweird.f32 %v937
  %vm944 = vmor %vm942, %vm943
  %v945 = vsel %vm944, %v937, %v941
  %v946 = vand.u32 2147483647, %v936
  %vm947 = vcmp.eq.f32.partialorder %v946, 8.507059e+37
  %v948 = vand.u32 %v936, 2147483648
  %v949 = vor.u32 1.1754944e-38, %v948
  %v950 = vsel %vm947, %v949, %v945
  %v951 = vmul.f32 1.0, %v950
  %v952 = vtanh.pop %v932
  %v953 = vmul.f32 %v951, %v900
  %955 = vrot.lane.b32.xlu0 %v952, 64
  %v956 = vpop.permute.xlu0 %955
  %v958 = vmul.f32 %v951, %v956
  %960 = vrot.lane.b32.xlu0 %v958, 32
  %v961 = vpop.permute.xlu0 %960
  %v963 = vadd.f32 %v953, %v961
  %v964 = vtanh.pop %v963
  %966 = vrot.lane.b32.xlu0 %v964, 64
  %v967 = vpop.permute.xlu0 %966
  %v969 = vmul.f32 %v951, %v967
  %971 = vrot.lane.b32.xlu0 %v969, 32
  %v972 = vpop.permute.xlu0 %971
  %v973 = vsel %vm116, %v972, 0
  %975 = vmatpush.msra.mxu0 0.0
  %976 = vmatpush.msra.mxu0 0.0
  %977 = vmatpush.msra.mxu0 0.0
  %978 = vmatpush.msra.mxu0 0.0
  %979 = vmatpush.msra.mxu0 0.0
  %980 = vmatpush.msra.mxu0 0.0
  %981 = vmatpush.msra.mxu0 0.0
  %982 = vmatpush.msra.mxu0 0.0
  %983 = vmatpush.msra.mxu0 0.0
  %984 = vmatpush.msra.mxu0 0.0
  %985 = vmatpush.msra.mxu0 0.0
  %986 = vmatpush.msra.mxu0 0.0
  %987 = vmatpush.msra.mxu0 %v653
  %988 = vmatpush.msra.mxu0 %v652
  %989 = vmatpush.msra.mxu0 %v651
  %990 = vmatpush.msra.mxu0 %v650
  %991 = vmatmul.f32.gmra.mxu0 %v973
  %v992 = vpop.f32.mrf.mxu0
  %v993 = vadd.f32 0.0, %v992
  %994 = vdwg.mxu0
  %v995 = vadd.f32 %v712, %v993
  %v996 = vxor.u32 %v995, 2147483648
  %v997 = vmul.f32 %v996, 1.442695
  %v998 = vpow.pop %v997
  %v999 = vadd.f32 %v998, 1.0
  %v1000 = vrcp.pop %v999
  %v1001 = vmul.f32 %v999, %v1000
  %v1002 = vsub.f32 1.0, %v1001
  %v1003 = vmul.f32 %v1000, %v1002
  %v1004 = vadd.f32 %v1000, %v1003
  %vm1005 = vweird.f32 %v999
  %vm1006 = vweird.f32 %v1000
  %vm1007 = vmor %vm1005, %vm1006
  %v1008 = vsel %vm1007, %v1000, %v1004
  %v1009 = vand.u32 2147483647, %v999
  %vm1010 = vcmp.eq.f32.partialorder %v1009, 8.507059e+37
  %v1011 = vand.u32 %v999, 2147483648
  %v1012 = vor.u32 1.1754944e-38, %v1011
  %v1013 = vsel %vm1010, %v1012, %v1008
  %v1014 = vmul.f32 1.0, %v1013
  %v1015 = vtanh.pop %v995
  %v1016 = vmul.f32 %v1014, %v963
  %1018 = vrot.lane.b32.xlu0 %v1015, 64
  %v1019 = vpop.permute.xlu0 %1018
  %v1021 = vmul.f32 %v1014, %v1019
  %1023 = vrot.lane.b32.xlu0 %v1021, 32
  %v1024 = vpop.permute.xlu0 %1023
  %v1026 = vadd.f32 %v1016, %v1024
  %v1027 = vtanh.pop %v1026
  %1029 = vrot.lane.b32.xlu0 %v1027, 64
  %v1030 = vpop.permute.xlu0 %1029
  %v1032 = vmul.f32 %v1014, %v1030
  %1034 = vrot.lane.b32.xlu0 %v1032, 32
  %v1035 = vpop.permute.xlu0 %1034
  %v1036 = vsel %vm116, %v1035, 0
  %1038 = vmatpush.msra.mxu0 0.0
  %1039 = vmatpush.msra.mxu0 0.0
  %1040 = vmatpush.msra.mxu0 0.0
  %1041 = vmatpush.msra.mxu0 0.0
  %1042 = vmatpush.msra.mxu0 0.0
  %1043 = vmatpush.msra.mxu0 0.0
  %1044 = vmatpush.msra.mxu0 0.0
  %1045 = vmatpush.msra.mxu0 0.0
  %1046 = vmatpush.msra.mxu0 0.0
  %1047 = vmatpush.msra.mxu0 0.0
  %1048 = vmatpush.msra.mxu0 0.0
  %1049 = vmatpush.msra.mxu0 0.0
  %1050 = vmatpush.msra.mxu0 %v653
  %1051 = vmatpush.msra.mxu0 %v652
  %1052 = vmatpush.msra.mxu0 %v651
  %1053 = vmatpush.msra.mxu0 %v650
  %1054 = vmatmul.f32.gmra.mxu0 %v1036
  %v1055 = vpop.f32.mrf.mxu0
  %v1056 = vadd.f32 0.0, %v1055
  %1057 = vdwg.mxu0
  %v1058 = vadd.f32 %v715, %v1056
  %v1059 = vxor.u32 %v1058, 2147483648
  %v1060 = vmul.f32 %v1059, 1.442695
  %v1061 = vpow.pop %v1060
  %v1062 = vadd.f32 %v1061, 1.0
  %v1063 = vrcp.pop %v1062
  %v1064 = vmul.f32 %v1062, %v1063
  %v1065 = vsub.f32 1.0, %v1064
  %v1066 = vmul.f32 %v1063, %v1065
  %v1067 = vadd.f32 %v1063, %v1066
  %vm1068 = vweird.f32 %v1062
  %vm1069 = vweird.f32 %v1063
  %vm1070 = vmor %vm1068, %vm1069
  %v1071 = vsel %vm1070, %v1063, %v1067
  %v1072 = vand.u32 2147483647, %v1062
  %vm1073 = vcmp.eq.f32.partialorder %v1072, 8.507059e+37
  %v1074 = vand.u32 %v1062, 2147483648
  %v1075 = vor.u32 1.1754944e-38, %v1074
  %v1076 = vsel %vm1073, %v1075, %v1071
  %v1077 = vmul.f32 1.0, %v1076
  %v1078 = vtanh.pop %v1058
  %v1079 = vmul.f32 %v1077, %v1026
  %1081 = vrot.lane.b32.xlu0 %v1078, 64
  %v1082 = vpop.permute.xlu0 %1081
  %v1084 = vmul.f32 %v1077, %v1082
  %1086 = vrot.lane.b32.xlu0 %v1084, 32
  %v1087 = vpop.permute.xlu0 %1086
  %v1089 = vadd.f32 %v1079, %v1087
  %v1090 = vtanh.pop %v1089
  %1092 = vrot.lane.b32.xlu0 %v1090, 64
  %v1093 = vpop.permute.xlu0 %1092
  %v1095 = vmul.f32 %v1077, %v1093
  %1097 = vrot.lane.b32.xlu0 %v1095, 32
  %v1098 = vpop.permute.xlu0 %1097
  %v1099 = vsel %vm116, %v1098, 0
  %1101 = vmatpush.msra.mxu0 0.0
  %1102 = vmatpush.msra.mxu0 0.0
  %1103 = vmatpush.msra.mxu0 0.0
  %1104 = vmatpush.msra.mxu0 0.0
  %1105 = vmatpush.msra.mxu0 0.0
  %1106 = vmatpush.msra.mxu0 0.0
  %1107 = vmatpush.msra.mxu0 0.0
  %1108 = vmatpush.msra.mxu0 0.0
  %1109 = vmatpush.msra.mxu0 0.0
  %1110 = vmatpush.msra.mxu0 0.0
  %1111 = vmatpush.msra.mxu0 0.0
  %1112 = vmatpush.msra.mxu0 0.0
  %1113 = vmatpush.msra.mxu0 %v653
  %1114 = vmatpush.msra.mxu0 %v652
  %1115 = vmatpush.msra.mxu0 %v651
  %1116 = vmatpush.msra.mxu0 %v650
  %1117 = vmatmul.f32.gmra.mxu0 %v1099
  %v1118 = vpop.f32.mrf.mxu0
  %v1119 = vadd.f32 0.0, %v1118
  %1120 = vdwg.mxu0
  %v1121 = vadd.f32 %v718, %v1119
  %v1122 = vxor.u32 %v1121, 2147483648
  %v1123 = vmul.f32 %v1122, 1.442695
  %v1124 = vpow.pop %v1123
  %v1125 = vadd.f32 %v1124, 1.0
  %v1126 = vrcp.pop %v1125
  %v1127 = vmul.f32 %v1125, %v1126
  %v1128 = vsub.f32 1.0, %v1127
  %v1129 = vmul.f32 %v1126, %v1128
  %v1130 = vadd.f32 %v1126, %v1129
  %vm1131 = vweird.f32 %v1125
  %vm1132 = vweird.f32 %v1126
  %vm1133 = vmor %vm1131, %vm1132
  %v1134 = vsel %vm1133, %v1126, %v1130
  %v1135 = vand.u32 2147483647, %v1125
  %vm1136 = vcmp.eq.f32.partialorder %v1135, 8.507059e+37
  %v1137 = vand.u32 %v1125, 2147483648
  %v1138 = vor.u32 1.1754944e-38, %v1137
  %v1139 = vsel %vm1136, %v1138, %v1134
  %v1140 = vmul.f32 1.0, %v1139
  %v1141 = vtanh.pop %v1121
  %v1142 = vmul.f32 %v1140, %v1089
  %1144 = vrot.lane.b32.xlu0 %v1141, 64
  %v1145 = vpop.permute.xlu0 %1144
  %v1147 = vmul.f32 %v1140, %v1145
  %1149 = vrot.lane.b32.xlu0 %v1147, 32
  %v1150 = vpop.permute.xlu0 %1149
  %v1152 = vadd.f32 %v1142, %v1150
  %v1153 = vtanh.pop %v1152
  %1155 = vrot.lane.b32.xlu0 %v1153, 64
  %v1156 = vpop.permute.xlu0 %1155
  %v1158 = vmul.f32 %v1140, %v1156
  %1160 = vrot.lane.b32.xlu0 %v1158, 32
  %v1161 = vpop.permute.xlu0 %1160
  %v1162 = vsel %vm116, %v1161, 0
  %1164 = vmatpush.msra.mxu0 0.0
  %1165 = vmatpush.msra.mxu0 0.0
  %1166 = vmatpush.msra.mxu0 0.0
  %1167 = vmatpush.msra.mxu0 0.0
  %1168 = vmatpush.msra.mxu0 0.0
  %1169 = vmatpush.msra.mxu0 0.0
  %1170 = vmatpush.msra.mxu0 0.0
  %1171 = vmatpush.msra.mxu0 0.0
  %1172 = vmatpush.msra.mxu0 0.0
  %1173 = vmatpush.msra.mxu0 0.0
  %1174 = vmatpush.msra.mxu0 0.0
  %1175 = vmatpush.msra.mxu0 0.0
  %1176 = vmatpush.msra.mxu0 %v653
  %1177 = vmatpush.msra.mxu0 %v652
  %1178 = vmatpush.msra.mxu0 %v651
  %1179 = vmatpush.msra.mxu0 %v650
  %1180 = vmatmul.f32.gmra.mxu0 %v1162
  %v1181 = vpop.f32.mrf.mxu0
  %v1182 = vadd.f32 0.0, %v1181
  %1183 = vdwg.mxu0
  %v1184 = vadd.f32 %v721, %v1182
  %v1185 = vxor.u32 %v1184, 2147483648
  %v1186 = vmul.f32 %v1185, 1.442695
  %v1187 = vpow.pop %v1186
  %v1188 = vadd.f32 %v1187, 1.0
  %v1189 = vrcp.pop %v1188
  %v1190 = vmul.f32 %v1188, %v1189
  %v1191 = vsub.f32 1.0, %v1190
  %v1192 = vmul.f32 %v1189, %v1191
  %v1193 = vadd.f32 %v1189, %v1192
  %vm1194 = vweird.f32 %v1188
  %vm1195 = vweird.f32 %v1189
  %vm1196 = vmor %vm1194, %vm1195
  %v1197 = vsel %vm1196, %v1189, %v1193
  %v1198 = vand.u32 2147483647, %v1188
  %vm1199 = vcmp.eq.f32.partialorder %v1198, 8.507059e+37
  %v1200 = vand.u32 %v1188, 2147483648
  %v1201 = vor.u32 1.1754944e-38, %v1200
  %v1202 = vsel %vm1199, %v1201, %v1197
  %v1203 = vmul.f32 1.0, %v1202
  %v1204 = vtanh.pop %v1184
  %v1205 = vmul.f32 %v1203, %v1152
  %1207 = vrot.lane.b32.xlu0 %v1204, 64
  %v1208 = vpop.permute.xlu0 %1207
  %v1210 = vmul.f32 %v1203, %v1208
  %1212 = vrot.lane.b32.xlu0 %v1210, 32
  %v1213 = vpop.permute.xlu0 %1212
  %v1215 = vadd.f32 %v1205, %v1213
  %v1216 = vtanh.pop %v1215
  %1218 = vrot.lane.b32.xlu0 %v1216, 64
  %v1219 = vpop.permute.xlu0 %1218
  %v1221 = vmul.f32 %v1203, %v1219
  %v1222 = vld [vmem:[%s7] sm:$0xff]
  %v1223 = vld [vmem:[%s7 + $0x8] sm:$0xff]
  %v1224 = vld [vmem:[%s7 + $0x10] sm:$0xff]
  %v1225 = vld [vmem:[%s7 + $0x18] sm:$0xff]
  %v1226 = vld [vmem:[%s8] sm:$0x1]
  %v1228 = vperm.slane %v1226, 0
  %1231 = vrot.lane.b32.xlu0 %v1221, 32
  %v1232 = vpop.permute.xlu0 %1231
  %v1233 = vsel %vm116, %v1232, 0
  %1235 = vmatpush.msra.mxu0 0.0
  %1236 = vmatpush.msra.mxu0 0.0
  %1237 = vmatpush.msra.mxu0 0.0
  %1238 = vmatpush.msra.mxu0 0.0
  %1239 = vmatpush.msra.mxu0 0.0
  %1240 = vmatpush.msra.mxu0 0.0
  %1241 = vmatpush.msra.mxu0 0.0
  %1242 = vmatpush.msra.mxu0 0.0
  %1243 = vmatpush.msra.mxu0 0.0
  %1244 = vmatpush.msra.mxu0 0.0
  %1245 = vmatpush.msra.mxu0 0.0
  %1246 = vmatpush.msra.mxu0 0.0
  %1247 = vmatpush.msra.mxu0 %v1225
  %1248 = vmatpush.msra.mxu0 %v1224
  %1249 = vmatpush.msra.mxu0 %v1223
  %1250 = vmatpush.msra.mxu0 %v1222
  %1251 = vmatmul.f32.gmra.mxu0 %v1233
  %v1252 = vpop.f32.mrf.mxu0
  %v1253 = vadd.f32 %v1228, %v1252
  %1254 = vdwg.mxu0
  %vm1255 = vcmask 64512
  %1256 = vst.msk [vmem:[%s9] sm:$0xff] %vm1255, %v1253
  // Predicated region
  $region38: #{lstm_forward.1} parent=0 // pred_check
    _
  $region39: #{lstm_forward.1} parent=0 // pred_check_branch
    %1258 = sbr.rel (0) target = $region41
  $region40: #{lstm_forward.1} parent=0 // pred_region
    _
  $region41: #{lstm_forward.1} parent=0 // pred_fallthru
    _
  // Predicated region
  $region42: #{lstm_forward.1} parent=0 // pred_check
    _
  $region43: #{lstm_forward.1} parent=0 // pred_check_branch
    %1260 = sbr.rel (0) target = $region45
  $region44: #{lstm_forward.1} parent=0 // pred_region
    _
  $region45: #{lstm_forward.1} parent=0 // pred_fallthru
    _

</llo_original>
